<compile_context>
chip_gen: v7x
topology: tpu7x:2x2x1
jax: 0.10.0
libtpu: 0.0.40
codegen_flags: <defaults>
</compile_context>

<pallas_src>
import math

import jax
import jax.numpy as jnp
import numpy as np
from jax.experimental import pallas as pl
from jax.experimental.pallas import tpu as pltpu

# ----------------------------- hyperparameters ------------------------------
VOCAB = 50
N_LAYERS = 2
D_MODEL = 32
FF_SIZE = 64
H = 4
DH = D_MODEL // H
LEFT = 2
RIGHT = 1
MASK_VAL = -1e15          # masking value from the module signature
CROSS_MASK_VAL = -1e30    # cross-batch entries in the fused scores (f32 exp -> 0)
LN_EPS = 1e-5
SCALE = 1.0 / math.sqrt(DH)

B = 2
M = 8
BM = B * M                # fused row count
S_COLS = H * BM           # score columns: heads tiled along lanes

LOG2_M = int(math.log2(M))
LOG2_BM = int(math.log2(BM))
LOG2_DH = int(math.log2(DH))
assert (1 << LOG2_M) == M and (1 << LOG2_BM) == BM and (1 << LOG2_DH) == DH
assert 4 * D_MODEL <= 128 and 3 * D_MODEL <= 128 and FF_SIZE + D_MODEL <= 128

# Weight-slab row layout (all matrix blocks at lane offset 0).
WQKV_R0 = 0                       # rows   0:32   cols 0:96   Wq|Wk|Wv (scale folded)
WO_R0 = WQKV_R0 + D_MODEL         # rows  32:64   cols 0:32   Wo
W1_R0 = WO_R0 + D_MODEL           # rows  64:96   cols 0:64   W1
W2_R0 = W1_R0 + D_MODEL           # rows  96:160  cols 0:32   W2
PAR_R0 = W2_R0 + FF_SIZE          # rows 160:168  LN params + biases
SLAB_ROWS = PAR_R0 + 8            # 168, multiple of 8
SLAB_COLS = 128
assert SLAB_ROWS % 8 == 0


# ------------------------------ helpers (glue) -------------------------------
def sinusoidal_pos_enc(length: int, d_model: int) -> jnp.ndarray:
    pos = np.arange(length, dtype=np.float32)[:, None]
    i = np.arange(d_model, dtype=np.float32)[None, :]
    angle = pos / np.power(10000.0, (2.0 * np.floor(i / 2.0)) / d_model)
    pe = np.where((np.arange(d_model)[None, :] % 2) == 0, np.sin(angle), np.cos(angle))
    return jnp.asarray(pe, jnp.float32)


def pack_params(layer_params) -> jnp.ndarray:
    """Pack all per-layer weights / LN params / biases into one lane-aligned
    [N_LAYERS, 168, 128] f32 slab (single input DMA).  The 1/sqrt(DH)
    attention scale is folded into Wq and bq here."""
    slab = jnp.zeros((N_LAYERS, SLAB_ROWS, SLAB_COLS), jnp.float32)
    for l, (ln1g, ln1b, wq, bq, wk, bk, wv, bv, wo, bo,
            ln2g, ln2b, w1, b1, w2, b2) in enumerate(layer_params):
        wqkv = jnp.concatenate([wq * SCALE, wk, wv], axis=1)          # [D, 3D]
        bqkv = jnp.concatenate([bq * SCALE, bk, bv], axis=1)[0]       # [3D]
        slab = slab.at[l, WQKV_R0:WQKV_R0 + D_MODEL, 0:3 * D_MODEL].set(wqkv)
        slab = slab.at[l, WO_R0:WO_R0 + D_MODEL, 0:D_MODEL].set(wo)
        slab = slab.at[l, W1_R0:W1_R0 + D_MODEL, 0:FF_SIZE].set(w1)
        slab = slab.at[l, W2_R0:W2_R0 + FF_SIZE, 0:D_MODEL].set(w2)
        # param row 0: ln1 gamma | ln1 beta | ln2 gamma | ln2 beta
        slab = slab.at[l, PAR_R0, 0:D_MODEL].set(ln1g[0])
        slab = slab.at[l, PAR_R0, D_MODEL:2 * D_MODEL].set(ln1b[0])
        slab = slab.at[l, PAR_R0, 2 * D_MODEL:3 * D_MODEL].set(ln2g[0])
        slab = slab.at[l, PAR_R0, 3 * D_MODEL:4 * D_MODEL].set(ln2b[0])
        # param row 1: bqkv (scale folded into bq part) | bo
        slab = slab.at[l, PAR_R0 + 1, 0:3 * D_MODEL].set(bqkv)
        slab = slab.at[l, PAR_R0 + 1, 3 * D_MODEL:4 * D_MODEL].set(bo[0])
        # param row 2: b1 | b2
        slab = slab.at[l, PAR_R0 + 2, 0:FF_SIZE].set(b1[0])
        slab = slab.at[l, PAR_R0 + 2, FF_SIZE:FF_SIZE + D_MODEL].set(b2[0])
    return slab


# ------------------------------ Pallas kernel --------------------------------
def _layer_norm(v, g, b):
    mu = jnp.mean(v, axis=-1, keepdims=True)
    var = jnp.mean(jnp.square(v - mu), axis=-1, keepdims=True)
    return (v - mu) * jax.lax.rsqrt(var + LN_EPS) * g + b


def _decoder_stack_kernel(len_ref, xpe_ref, slab_ref, o_ref):
    bf16 = jnp.bfloat16
    x = xpe_ref[0:BM, :]                  # [BM, D]  emb + pos-enc (batch fused into rows)
    pe = xpe_ref[BM:2 * BM, :]            # [BM, D]  per-layer relative pos-enc

    # ---- attention validity / bias masks, built once, shared by all layers ----
    # Score columns are the H heads tiled along lanes: col c -> head c//BM, key c%BM.
    qi = jax.lax.broadcasted_iota(jnp.int32, (BM, S_COLS), 0)     # flat query index
    ci = jax.lax.broadcasted_iota(jnp.int32, (BM, S_COLS), 1)     # score column index
    kj = ci & (BM - 1)                                            # flat key index
    bq_id = qi >> LOG2_M
    bk_id = kj >> LOG2_M
    mq = qi & (M - 1)
    mk = kj & (M - 1)
    same_batch = bq_id == bk_id
    window = (mk >= mq - LEFT) & (mk <= mq + RIGHT)               # truncated window
    klen = jnp.zeros((BM, S_COLS), jnp.int32)
    for b in range(B):                                            # lengths live in SMEM
        klen = jnp.where(bk_id == b, len_ref[b], klen)
    key_ok = mk < klen
    valid = same_batch & window & key_ok                          # [BM, S_COLS]
    # Invalid same-batch keys use MASK_VAL (matches reference); cross-batch keys use a
    # much larger negative so they vanish (exp underflows to 0 in f32) even in
    # fully-masked query rows, which then reproduce the reference's uniform 1/M.
    masked_bias = jnp.where(same_batch, MASK_VAL, CROSS_MASK_VAL).astype(jnp.float32)

    # Block-diagonal head map [S_COLS, D]: 1 where row's head == column's head.
    hr = jax.lax.broadcasted_iota(jnp.int32, (S_COLS, D_MODEL), 0)
    hd = jax.lax.broadcasted_iota(jnp.int32, (S_COLS, D_MODEL), 1)
    head_map = (hr >> LOG2_BM) == (hd >> LOG2_DH)
    head_map_bf = head_map.astype(bf16)

    out = x                                # residual stream stays f32
    for l in range(N_LAYERS):              # static loop; both layers VMEM-resident
        # ---- weights (single slab, lane-offset-0 blocks, cast once to bf16) ----
        wqkv = slab_ref[l, WQKV_R0:WQKV_R0 + D_MODEL, 0:3 * D_MODEL].astype(bf16)
        wo = slab_ref[l, WO_R0:WO_R0 + D_MODEL, 0:D_MODEL].astype(bf16)
        w1 = slab_ref[l, W1_R0:W1_R0 + D_MODEL, 0:FF_SIZE].astype(bf16)
        w2 = slab_ref[l, W2_R0:W2_R0 + FF_SIZE, 0:D_MODEL].astype(bf16)
        pblk = slab_ref[l, PAR_R0:PAR_R0 + 8, :]                  # [8,128] f32 params
        ln1g = pblk[0:1, 0:D_MODEL]
        ln1b = pblk[0:1, D_MODEL:2 * D_MODEL]
        ln2g = pblk[0:1, 2 * D_MODEL:3 * D_MODEL]
        ln2b = pblk[0:1, 3 * D_MODEL:4 * D_MODEL]
        bqkv = pblk[1:2, 0:3 * D_MODEL]
        bo = pblk[1:2, 3 * D_MODEL:4 * D_MODEL]
        b1 = pblk[2:3, 0:FF_SIZE]
        b2 = pblk[2:3, FF_SIZE:FF_SIZE + D_MODEL]

        # --- truncated relative MHSA (pre-norm); dropout == identity (eval) ---
        xn = _layer_norm(out, ln1g, ln1b) + pe
        qkv = jnp.dot(xn.astype(bf16), wqkv,
                      preferred_element_type=jnp.float32) + bqkv            # [BM, 3D]
        q = qkv[:, 0:D_MODEL].astype(bf16)                 # scale folded into Wq/bq
        k = qkv[:, D_MODEL:2 * D_MODEL]
        v = qkv[:, 2 * D_MODEL:3 * D_MODEL]
        # Block-diagonal packing: all H heads handled by single matmuls.
        kblk = jnp.concatenate([k] * H, axis=0).astype(bf16) * head_map_bf  # [S_COLS, D]
        vblk = jnp.concatenate([v] * H, axis=0).astype(bf16) * head_map_bf  # [S_COLS, D]

        s = jax.lax.dot_general(q, kblk, (((1,), (1,)), ((), ())),
                                preferred_element_type=jnp.float32)         # [BM, S_COLS]
        s = jnp.where(valid, s, masked_bias)
        s = s - jnp.max(s, axis=-1, keepdims=True)   # global max; per-head softmax invariant
        p = jnp.exp(s).astype(bf16)
        # Unnormalized contexts land directly in [BM, D] layout (heads in their lanes);
        # the per-head denominator comes out of p @ head_map already broadcast per lane.
        ctx_un = jnp.dot(p, vblk, preferred_element_type=jnp.float32)       # [BM, D]
        den = jnp.dot(p, head_map_bf, preferred_element_type=jnp.float32)   # [BM, D]
        ctx = ctx_un * pl.reciprocal(den, approx=True)

        attn = jnp.dot(ctx.astype(bf16), wo, preferred_element_type=jnp.float32) + bo
        h1 = out + attn

        # --- position-wise feed forward (pre-norm) ---
        hn = _layer_norm(h1, ln2g, ln2b)
        f = jnp.dot(hn.astype(bf16), w1, preferred_element_type=jnp.float32) + b1
        f = jnp.maximum(f, 0.0)
        y = jnp.dot(f.astype(bf16), w2, preferred_element_type=jnp.float32) + b2
        out = h1 + y

    o_ref[...] = out


# --------------------------- full decoder forward ----------------------------
@jax.jit
def decoder_forward(token_ids, mask, emb_table, slab):
    """token_ids: [B, M] int32, mask: [B, M] bool -> ([B, M, D], [B])."""
    lengths = jnp.sum(mask.astype(jnp.int32), axis=-1)          # [B] int32 (SMEM)
    pe = sinusoidal_pos_enc(M, D_MODEL)
    out = jnp.take(emb_table, token_ids, axis=0) + pe[None]     # embedding + add_pos_enc
    x_flat = out.reshape(BM, D_MODEL)                           # fuse batch into rows
    pe_bm = jnp.tile(pe, (B, 1))
    xpe = jnp.concatenate([x_flat, pe_bm], axis=0)              # [2*BM, D] one activation DMA

    y = pl.pallas_call(
        _decoder_stack_kernel,
        out_shape=jax.ShapeDtypeStruct((BM, D_MODEL), jnp.float32),
        in_specs=[
            pl.BlockSpec(memory_space=pltpu.MemorySpace.SMEM),   # lengths
            pl.BlockSpec(memory_space=pltpu.MemorySpace.VMEM),   # x | pe slab
            pl.BlockSpec(memory_space=pltpu.MemorySpace.VMEM),   # weight slab
        ],
        out_specs=pl.BlockSpec(memory_space=pltpu.MemorySpace.VMEM),
    )(lengths, xpe, slab)
    return y.reshape(B, M, D_MODEL), lengths


# ------------------------------ pure-JAX reference ---------------------------
def reference_forward(token_ids, mask, emb_table, layer_params):
    hi = jax.lax.Precision.HIGHEST
    lengths = jnp.sum(mask.astype(jnp.int32), axis=-1)
    out = jnp.take(emb_table, token_ids, axis=0)
    pe = sinusoidal_pos_enc(M, D_MODEL)
    out = out + pe[None]
    qi = np.arange(M)[:, None]
    kj = np.arange(M)[None, :]
    window = jnp.asarray((kj >= qi - LEFT) & (kj <= qi + RIGHT))
    valid = window[None] & mask[:, None, :]                # [B, M, M]

    def ln(v, g, b):
        mu = v.mean(-1, keepdims=True)
        var = ((v - mu) ** 2).mean(-1, keepdims=True)
        return (v - mu) * jax.lax.rsqrt(var + LN_EPS) * g + b

    for (ln1g, ln1b, wq, bq, wk, bk, wv, bv, wo, bo,
         ln2g, ln2b, w1, b1, w2, b2) in layer_params:
        xn = ln(out, ln1g, ln1b) + pe[None]
        q = jnp.einsum("bmd,de->bme", xn, wq, precision=hi) + bq
        k = jnp.einsum("bmd,de->bme", xn, wk, precision=hi) + bk
        v = jnp.einsum("bmd,de->bme", xn, wv, precision=hi) + bv
        q = q.reshape(B, M, H, DH)
        k = k.reshape(B, M, H, DH)
        v = v.reshape(B, M, H, DH)
        s = jnp.einsum("bqhd,bkhd->bhqk", q, k, precision=hi) / math.sqrt(DH)
        s = jnp.where(valid[:, None], s, MASK_VAL)
        p = jax.nn.softmax(s, axis=-1)
        ctx = jnp.einsum("bhqk,bkhd->bqhd", p, v, precision=hi).reshape(B, M, D_MODEL)
        attn = jnp.einsum("bmd,de->bme", ctx, wo, precision=hi) + bo
        h1 = out + attn
        hn = ln(h1, ln2g, ln2b)
        f = jax.nn.relu(jnp.einsum("bmd,df->bmf", hn, w1, precision=hi) + b1)
        f = jnp.einsum("bmf,fd->bmd", f, w2, precision=hi) + b2
        out = h1 + f
    return out, lengths


# --------------------------- deterministic parameters ------------------------
def init_params(key):
    keys = jax.random.split(key, 1 + N_LAYERS)
    emb = 0.1 * jax.random.normal(keys[0], (VOCAB, D_MODEL), jnp.float32)

    def lin(kk, fin, fout):
        return jax.random.normal(kk, (fin, fout), jnp.float32) / math.sqrt(fin)

    layers = []
    for l in range(N_LAYERS):
        k = jax.random.split(keys[1 + l], 12)
        params = (
            jnp.ones((1, D_MODEL), jnp.float32),                       # ln1 gamma
            0.02 * jax.random.normal(k[0], (1, D_MODEL), jnp.float32), # ln1 beta
            lin(k[1], D_MODEL, D_MODEL), 0.02 * jax.random.normal(k[2], (1, D_MODEL)),
            lin(k[3], D_MODEL, D_MODEL), 0.02 * jax.random.normal(k[4], (1, D_MODEL)),
            lin(k[5], D_MODEL, D_MODEL), 0.02 * jax.random.normal(k[6], (1, D_MODEL)),
            lin(k[7], D_MODEL, D_MODEL), 0.02 * jax.random.normal(k[8], (1, D_MODEL)),
            jnp.ones((1, D_MODEL), jnp.float32),                       # ln2 gamma
            0.02 * jax.random.normal(k[9], (1, D_MODEL), jnp.float32), # ln2 beta
            lin(k[10], D_MODEL, FF_SIZE), jnp.zeros((1, FF_SIZE), jnp.float32),
            lin(k[11], FF_SIZE, D_MODEL), jnp.zeros((1, D_MODEL), jnp.float32),
        )
        layers.append(params)
    return emb, layers


if __name__ == "__main__":
    key = jax.random.PRNGKey(0)
    kp, kx = jax.random.split(key)
    emb_table, layer_params = init_params(kp)
    slab = pack_params(layer_params)

    token_ids = jax.random.randint(kx, (B, M), 0, VOCAB, dtype=jnp.int32)
    seq_lens = np.array([M, 5])
    mask = jnp.asarray(np.arange(M)[None, :] < seq_lens[:, None])     # [B, M] bool

    out, lens = decoder_forward(token_ids, mask, emb_table, slab)
    out = jax.block_until_ready(out)
    lens = jax.block_until_ready(lens)

    ref_out, ref_lens = reference_forward(token_ids, mask, emb_table, layer_params)

    assert out.shape == (B, M, D_MODEL) and lens.shape == (B,)
    assert np.all(np.isfinite(np.asarray(out)))
    assert np.array_equal(np.asarray(lens), np.asarray(ref_lens))
    # Kernel uses bf16 MXU operands (f32 accumulation / softmax / LN), so compare
    # against the f32 HIGHEST-precision reference with a bf16-appropriate tolerance.
    np.testing.assert_allclose(np.asarray(out), np.asarray(ref_out), rtol=5e-2, atol=5e-2)

    print("KERNEL_OK")
</pallas_src>

<mosaic_0001>
module attributes {stable_mosaic.version = 11 : i64} {
  func.func @_decoder_stack_kernel(%arg0: memref<2xi32, #tpu.memory_space<smem>>, %arg1: memref<32x32xf32, #tpu.memory_space<vmem>>, %arg2: memref<2x168x128xf32, #tpu.memory_space<vmem>>, %arg3: memref<16x32xf32, #tpu.memory_space<vmem>>) attributes {dimension_semantics = [], scalar_prefetch = 0 : i64, scratch_operands = 0 : i64, tpu.core_type = #tpu.core_type<tc>} {
    %c0 = arith.constant 0 : index
    %c0_0 = arith.constant 0 : index
    %0 = vector.load %arg1[%c0, %c0_0] : memref<32x32xf32, #tpu.memory_space<vmem>>, vector<16x32xf32>
    %c16 = arith.constant 16 : index
    %c0_1 = arith.constant 0 : index
    %1 = vector.load %arg1[%c16, %c0_1] : memref<32x32xf32, #tpu.memory_space<vmem>>, vector<16x32xf32>
    %2 = tpu.iota {dimensions = array<i32: 0>} : vector<16x64xi32>
    %3 = tpu.iota {dimensions = array<i32: 1>} : vector<16x64xi32>
    %c15_i32 = arith.constant 15 : i32
    %4 = vector.broadcast %c15_i32 : i32 to vector<16x64xi32>
    %5 = arith.andi %3, %4 : vector<16x64xi32>
    %c3_i32 = arith.constant 3 : i32
    %6 = vector.broadcast %c3_i32 : i32 to vector<16x64xi32>
    %7 = arith.shrsi %2, %6 : vector<16x64xi32>
    %c3_i32_2 = arith.constant 3 : i32
    %8 = vector.broadcast %c3_i32_2 : i32 to vector<16x64xi32>
    %9 = arith.shrsi %5, %8 : vector<16x64xi32>
    %c7_i32 = arith.constant 7 : i32
    %10 = vector.broadcast %c7_i32 : i32 to vector<16x64xi32>
    %11 = arith.andi %2, %10 : vector<16x64xi32>
    %c7_i32_3 = arith.constant 7 : i32
    %12 = vector.broadcast %c7_i32_3 : i32 to vector<16x64xi32>
    %13 = arith.andi %5, %12 : vector<16x64xi32>
    %14 = arith.cmpi eq, %7, %9 : vector<16x64xi32>
    %c2_i32 = arith.constant 2 : i32
    %15 = vector.broadcast %c2_i32 : i32 to vector<16x64xi32>
    %16 = arith.subi %11, %15 : vector<16x64xi32>
    %17 = arith.cmpi sge, %13, %16 : vector<16x64xi32>
    %c1_i32 = arith.constant 1 : i32
    %18 = vector.broadcast %c1_i32 : i32 to vector<16x64xi32>
    %19 = arith.addi %11, %18 : vector<16x64xi32>
    %20 = arith.cmpi sle, %13, %19 : vector<16x64xi32>
    %21 = arith.andi %17, %20 : vector<16x64xi1>
    %c0_i32 = arith.constant 0 : i32
    %22 = vector.broadcast %c0_i32 : i32 to vector<16x64xi32>
    %c0_i32_4 = arith.constant 0 : i32
    %23 = vector.broadcast %c0_i32_4 : i32 to vector<16x64xi32>
    %24 = arith.cmpi eq, %9, %23 : vector<16x64xi32>
    %c0_5 = arith.constant 0 : index
    %25 = memref.load %arg0[%c0_5] : memref<2xi32, #tpu.memory_space<smem>>
    %26 = vector.broadcast %25 : i32 to vector<16x64xi32>
    %27 = arith.select %24, %26, %22 : vector<16x64xi1>, vector<16x64xi32>
    %c1_i32_6 = arith.constant 1 : i32
    %28 = vector.broadcast %c1_i32_6 : i32 to vector<16x64xi32>
    %29 = arith.cmpi eq, %9, %28 : vector<16x64xi32>
    %c1 = arith.constant 1 : index
    %30 = memref.load %arg0[%c1] : memref<2xi32, #tpu.memory_space<smem>>
    %31 = vector.broadcast %30 : i32 to vector<16x64xi32>
    %32 = arith.select %29, %31, %27 : vector<16x64xi1>, vector<16x64xi32>
    %33 = arith.cmpi slt, %13, %32 : vector<16x64xi32>
    %34 = arith.andi %14, %21 : vector<16x64xi1>
    %35 = arith.andi %34, %33 : vector<16x64xi1>
    %cst = arith.constant -9.99999986E+14 : f32
    %cst_7 = arith.constant -1.000000e+30 : f32
    %36 = vector.broadcast %cst : f32 to vector<16x64xf32>
    %37 = vector.broadcast %cst_7 : f32 to vector<16x64xf32>
    %38 = arith.select %14, %36, %37 : vector<16x64xi1>, vector<16x64xf32>
    %39 = tpu.iota {dimensions = array<i32: 0>} : vector<64x32xi32>
    %40 = tpu.iota {dimensions = array<i32: 1>} : vector<64x32xi32>
    %c4_i32 = arith.constant 4 : i32
    %41 = vector.broadcast %c4_i32 : i32 to vector<64x32xi32>
    %42 = arith.shrsi %39, %41 : vector<64x32xi32>
    %c3_i32_8 = arith.constant 3 : i32
    %43 = vector.broadcast %c3_i32_8 : i32 to vector<64x32xi32>
    %44 = arith.shrsi %40, %43 : vector<64x32xi32>
    %45 = arith.cmpi eq, %42, %44 : vector<64x32xi32>
    %46 = arith.extui %45 : vector<64x32xi1> to vector<64x32xi32>
    %47 = arith.sitofp %46 : vector<64x32xi32> to vector<64x32xf32>
    %48 = arith.truncf %47 : vector<64x32xf32> to vector<64x32xbf16>
    %c0_9 = arith.constant 0 : index
    %c0_10 = arith.constant 0 : index
    %c0_11 = arith.constant 0 : index
    %49 = vector.load %arg2[%c0_9, %c0_10, %c0_11] : memref<2x168x128xf32, #tpu.memory_space<vmem>>, vector<1x32x96xf32>
    %50 = vector.shape_cast %49 : vector<1x32x96xf32> to vector<32x96xf32>
    %51 = arith.truncf %50 : vector<32x96xf32> to vector<32x96xbf16>
    %c0_12 = arith.constant 0 : index
    %c32 = arith.constant 32 : index
    %c0_13 = arith.constant 0 : index
    %52 = vector.load %arg2[%c0_12, %c32, %c0_13] : memref<2x168x128xf32, #tpu.memory_space<vmem>>, vector<1x32x32xf32>
    %53 = vector.shape_cast %52 : vector<1x32x32xf32> to vector<32x32xf32>
    %54 = arith.truncf %53 : vector<32x32xf32> to vector<32x32xbf16>
    %c0_14 = arith.constant 0 : index
    %c64 = arith.constant 64 : index
    %c0_15 = arith.constant 0 : index
    %55 = vector.load %arg2[%c0_14, %c64, %c0_15] : memref<2x168x128xf32, #tpu.memory_space<vmem>>, vector<1x32x64xf32>
    %56 = vector.shape_cast %55 : vector<1x32x64xf32> to vector<32x64xf32>
    %57 = arith.truncf %56 : vector<32x64xf32> to vector<32x64xbf16>
    %c0_16 = arith.constant 0 : index
    %c96 = arith.constant 96 : index
    %c0_17 = arith.constant 0 : index
    %58 = vector.load %arg2[%c0_16, %c96, %c0_17] : memref<2x168x128xf32, #tpu.memory_space<vmem>>, vector<1x64x32xf32>
    %59 = vector.shape_cast %58 : vector<1x64x32xf32> to vector<64x32xf32>
    %60 = arith.truncf %59 : vector<64x32xf32> to vector<64x32xbf16>
    %c0_18 = arith.constant 0 : index
    %c160 = arith.constant 160 : index
    %c0_19 = arith.constant 0 : index
    %61 = vector.load %arg2[%c0_18, %c160, %c0_19] : memref<2x168x128xf32, #tpu.memory_space<vmem>>, vector<1x8x128xf32>
    %62 = vector.shape_cast %61 : vector<1x8x128xf32> to vector<8x128xf32>
    %63 = vector.extract_strided_slice %62 {offsets = [0, 0], sizes = [1, 32], strides = [1, 1]} : vector<8x128xf32> to vector<1x32xf32>
    %64 = vector.extract_strided_slice %62 {offsets = [0, 32], sizes = [1, 32], strides = [1, 1]} : vector<8x128xf32> to vector<1x32xf32>
    %65 = vector.extract_strided_slice %62 {offsets = [0, 64], sizes = [1, 32], strides = [1, 1]} : vector<8x128xf32> to vector<1x32xf32>
    %66 = vector.extract_strided_slice %62 {offsets = [0, 96], sizes = [1, 32], strides = [1, 1]} : vector<8x128xf32> to vector<1x32xf32>
    %67 = vector.extract_strided_slice %62 {offsets = [1, 0], sizes = [1, 96], strides = [1, 1]} : vector<8x128xf32> to vector<1x96xf32>
    %68 = vector.extract_strided_slice %62 {offsets = [1, 96], sizes = [1, 32], strides = [1, 1]} : vector<8x128xf32> to vector<1x32xf32>
    %69 = vector.extract_strided_slice %62 {offsets = [2, 0], sizes = [1, 64], strides = [1, 1]} : vector<8x128xf32> to vector<1x64xf32>
    %70 = vector.extract_strided_slice %62 {offsets = [2, 64], sizes = [1, 32], strides = [1, 1]} : vector<8x128xf32> to vector<1x32xf32>
    %cst_20 = arith.constant dense<0.000000e+00> : vector<16xf32>
    %71 = vector.multi_reduction <add>, %0, %cst_20 [1] : vector<16x32xf32> to vector<16xf32>
    %72 = vector.shape_cast %71 : vector<16xf32> to vector<16x1xf32>
    %cst_21 = arith.constant 3.200000e+01 : f32
    %73 = vector.broadcast %cst_21 : f32 to vector<16x1xf32>
    %74 = arith.divf %72, %73 : vector<16x1xf32>
    %75 = vector.broadcast %74 : vector<16x1xf32> to vector<16x32xf32>
    %76 = arith.subf %0, %75 : vector<16x32xf32>
    %77 = arith.mulf %76, %76 : vector<16x32xf32>
    %cst_22 = arith.constant dense<0.000000e+00> : vector<16xf32>
    %78 = vector.multi_reduction <add>, %77, %cst_22 [1] : vector<16x32xf32> to vector<16xf32>
    %79 = vector.shape_cast %78 : vector<16xf32> to vector<16x1xf32>
    %cst_23 = arith.constant 3.200000e+01 : f32
    %80 = vector.broadcast %cst_23 : f32 to vector<16x1xf32>
    %81 = arith.divf %79, %80 : vector<16x1xf32>
    %82 = vector.broadcast %74 : vector<16x1xf32> to vector<16x32xf32>
    %83 = arith.subf %0, %82 : vector<16x32xf32>
    %cst_24 = arith.constant 9.99999974E-6 : f32
    %84 = vector.broadcast %cst_24 : f32 to vector<16x1xf32>
    %85 = arith.addf %81, %84 : vector<16x1xf32>
    %86 = math.rsqrt %85 : vector<16x1xf32>
    %87 = vector.broadcast %86 : vector<16x1xf32> to vector<16x32xf32>
    %88 = arith.mulf %83, %87 : vector<16x32xf32>
    %89 = vector.broadcast %63 : vector<1x32xf32> to vector<16x32xf32>
    %90 = arith.mulf %88, %89 : vector<16x32xf32>
    %91 = vector.broadcast %64 : vector<1x32xf32> to vector<16x32xf32>
    %92 = arith.addf %90, %91 : vector<16x32xf32>
    %93 = arith.addf %92, %1 : vector<16x32xf32>
    %94 = arith.truncf %93 : vector<16x32xf32> to vector<16x32xbf16>
    %cst_25 = arith.constant dense<0.000000e+00> : vector<16x96xf32>
    %95 = tpu.matmul %94, %51, %cst_25 {dimension_numbers = #tpu.dot_dimension_numbers<[1], [0], [0], [1], [0, 0, 1, 1], [], []>} : vector<16x32xbf16>, vector<32x96xbf16>, vector<16x96xf32> -> vector<16x96xf32>
    %96 = vector.broadcast %67 : vector<1x96xf32> to vector<16x96xf32>
    %97 = arith.addf %95, %96 : vector<16x96xf32>
    %98 = vector.extract_strided_slice %97 {offsets = [0, 0], sizes = [16, 32], strides = [1, 1]} : vector<16x96xf32> to vector<16x32xf32>
    %99 = arith.truncf %98 : vector<16x32xf32> to vector<16x32xbf16>
    %100 = vector.extract_strided_slice %97 {offsets = [0, 32], sizes = [16, 32], strides = [1, 1]} : vector<16x96xf32> to vector<16x32xf32>
    %101 = vector.extract_strided_slice %97 {offsets = [0, 64], sizes = [16, 32], strides = [1, 1]} : vector<16x96xf32> to vector<16x32xf32>
    %102 = tpu.concatenate %100, %100, %100, %100 in 0 : vector<16x32xf32>, vector<16x32xf32>, vector<16x32xf32>, vector<16x32xf32> -> vector<64x32xf32>
    %103 = arith.truncf %102 : vector<64x32xf32> to vector<64x32xbf16>
    %104 = arith.mulf %103, %48 : vector<64x32xbf16>
    %105 = tpu.concatenate %101, %101, %101, %101 in 0 : vector<16x32xf32>, vector<16x32xf32>, vector<16x32xf32>, vector<16x32xf32> -> vector<64x32xf32>
    %106 = arith.truncf %105 : vector<64x32xf32> to vector<64x32xbf16>
    %107 = arith.mulf %106, %48 : vector<64x32xbf16>
    %cst_26 = arith.constant dense<0.000000e+00> : vector<16x64xf32>
    %108 = tpu.matmul %99, %104, %cst_26 {dimension_numbers = #tpu.dot_dimension_numbers<[1], [1], [0], [0], [0, 0, 1, 0], [], []>} : vector<16x32xbf16>, vector<64x32xbf16>, vector<16x64xf32> -> vector<16x64xf32>
    %109 = arith.select %35, %108, %38 : vector<16x64xi1>, vector<16x64xf32>
    %cst_27 = arith.constant dense<0xFF800000> : vector<16xf32>
    %110 = vector.multi_reduction <maximumf>, %109, %cst_27 [1] : vector<16x64xf32> to vector<16xf32>
    %111 = vector.shape_cast %110 : vector<16xf32> to vector<16x1xf32>
    %112 = vector.broadcast %111 : vector<16x1xf32> to vector<16x64xf32>
    %113 = arith.subf %109, %112 : vector<16x64xf32>
    %114 = math.exp %113 : vector<16x64xf32>
    %115 = arith.truncf %114 : vector<16x64xf32> to vector<16x64xbf16>
    %cst_28 = arith.constant dense<0.000000e+00> : vector<16x32xf32>
    %116 = tpu.matmul %115, %107, %cst_28 {dimension_numbers = #tpu.dot_dimension_numbers<[1], [0], [0], [1], [0, 0, 1, 1], [], []>} : vector<16x64xbf16>, vector<64x32xbf16>, vector<16x32xf32> -> vector<16x32xf32>
    %cst_29 = arith.constant dense<0.000000e+00> : vector<16x32xf32>
    %117 = tpu.matmul %115, %48, %cst_29 {dimension_numbers = #tpu.dot_dimension_numbers<[1], [0], [0], [1], [0, 0, 1, 1], [], []>} : vector<16x64xbf16>, vector<64x32xbf16>, vector<16x32xf32> -> vector<16x32xf32>
    %118 = tpu.reciprocal %117 {approx = true} : vector<16x32xf32> -> vector<16x32xf32>
    %119 = arith.mulf %116, %118 : vector<16x32xf32>
    %120 = arith.truncf %119 : vector<16x32xf32> to vector<16x32xbf16>
    %cst_30 = arith.constant dense<0.000000e+00> : vector<16x32xf32>
    %121 = tpu.matmul %120, %54, %cst_30 {dimension_numbers = #tpu.dot_dimension_numbers<[1], [0], [0], [1], [0, 0, 1, 1], [], []>} : vector<16x32xbf16>, vector<32x32xbf16>, vector<16x32xf32> -> vector<16x32xf32>
    %122 = vector.broadcast %68 : vector<1x32xf32> to vector<16x32xf32>
    %123 = arith.addf %121, %122 : vector<16x32xf32>
    %124 = arith.addf %0, %123 : vector<16x32xf32>
    %cst_31 = arith.constant dense<0.000000e+00> : vector<16xf32>
    %125 = vector.multi_reduction <add>, %124, %cst_31 [1] : vector<16x32xf32> to vector<16xf32>
    %126 = vector.shape_cast %125 : vector<16xf32> to vector<16x1xf32>
    %cst_32 = arith.constant 3.200000e+01 : f32
    %127 = vector.broadcast %cst_32 : f32 to vector<16x1xf32>
    %128 = arith.divf %126, %127 : vector<16x1xf32>
    %129 = vector.broadcast %128 : vector<16x1xf32> to vector<16x32xf32>
    %130 = arith.subf %124, %129 : vector<16x32xf32>
    %131 = arith.mulf %130, %130 : vector<16x32xf32>
    %cst_33 = arith.constant dense<0.000000e+00> : vector<16xf32>
    %132 = vector.multi_reduction <add>, %131, %cst_33 [1] : vector<16x32xf32> to vector<16xf32>
    %133 = vector.shape_cast %132 : vector<16xf32> to vector<16x1xf32>
    %cst_34 = arith.constant 3.200000e+01 : f32
    %134 = vector.broadcast %cst_34 : f32 to vector<16x1xf32>
    %135 = arith.divf %133, %134 : vector<16x1xf32>
    %136 = vector.broadcast %128 : vector<16x1xf32> to vector<16x32xf32>
    %137 = arith.subf %124, %136 : vector<16x32xf32>
    %cst_35 = arith.constant 9.99999974E-6 : f32
    %138 = vector.broadcast %cst_35 : f32 to vector<16x1xf32>
    %139 = arith.addf %135, %138 : vector<16x1xf32>
    %140 = math.rsqrt %139 : vector<16x1xf32>
    %141 = vector.broadcast %140 : vector<16x1xf32> to vector<16x32xf32>
    %142 = arith.mulf %137, %141 : vector<16x32xf32>
    %143 = vector.broadcast %65 : vector<1x32xf32> to vector<16x32xf32>
    %144 = arith.mulf %142, %143 : vector<16x32xf32>
    %145 = vector.broadcast %66 : vector<1x32xf32> to vector<16x32xf32>
    %146 = arith.addf %144, %145 : vector<16x32xf32>
    %147 = arith.truncf %146 : vector<16x32xf32> to vector<16x32xbf16>
    %cst_36 = arith.constant dense<0.000000e+00> : vector<16x64xf32>
    %148 = tpu.matmul %147, %57, %cst_36 {dimension_numbers = #tpu.dot_dimension_numbers<[1], [0], [0], [1], [0, 0, 1, 1], [], []>} : vector<16x32xbf16>, vector<32x64xbf16>, vector<16x64xf32> -> vector<16x64xf32>
    %149 = vector.broadcast %69 : vector<1x64xf32> to vector<16x64xf32>
    %150 = arith.addf %148, %149 : vector<16x64xf32>
    %cst_37 = arith.constant 0.000000e+00 : f32
    %151 = vector.broadcast %cst_37 : f32 to vector<16x64xf32>
    %152 = arith.maximumf %150, %151 : vector<16x64xf32>
    %153 = arith.truncf %152 : vector<16x64xf32> to vector<16x64xbf16>
    %cst_38 = arith.constant dense<0.000000e+00> : vector<16x32xf32>
    %154 = tpu.matmul %153, %60, %cst_38 {dimension_numbers = #tpu.dot_dimension_numbers<[1], [0], [0], [1], [0, 0, 1, 1], [], []>} : vector<16x64xbf16>, vector<64x32xbf16>, vector<16x32xf32> -> vector<16x32xf32>
    %155 = vector.broadcast %70 : vector<1x32xf32> to vector<16x32xf32>
    %156 = arith.addf %154, %155 : vector<16x32xf32>
    %157 = arith.addf %124, %156 : vector<16x32xf32>
    %c1_39 = arith.constant 1 : index
    %c0_40 = arith.constant 0 : index
    %c0_41 = arith.constant 0 : index
    %158 = vector.load %arg2[%c1_39, %c0_40, %c0_41] : memref<2x168x128xf32, #tpu.memory_space<vmem>>, vector<1x32x96xf32>
    %159 = vector.shape_cast %158 : vector<1x32x96xf32> to vector<32x96xf32>
    %160 = arith.truncf %159 : vector<32x96xf32> to vector<32x96xbf16>
    %c1_42 = arith.constant 1 : index
    %c32_43 = arith.constant 32 : index
    %c0_44 = arith.constant 0 : index
    %161 = vector.load %arg2[%c1_42, %c32_43, %c0_44] : memref<2x168x128xf32, #tpu.memory_space<vmem>>, vector<1x32x32xf32>
    %162 = vector.shape_cast %161 : vector<1x32x32xf32> to vector<32x32xf32>
    %163 = arith.truncf %162 : vector<32x32xf32> to vector<32x32xbf16>
    %c1_45 = arith.constant 1 : index
    %c64_46 = arith.constant 64 : index
    %c0_47 = arith.constant 0 : index
    %164 = vector.load %arg2[%c1_45, %c64_46, %c0_47] : memref<2x168x128xf32, #tpu.memory_space<vmem>>, vector<1x32x64xf32>
    %165 = vector.shape_cast %164 : vector<1x32x64xf32> to vector<32x64xf32>
    %166 = arith.truncf %165 : vector<32x64xf32> to vector<32x64xbf16>
    %c1_48 = arith.constant 1 : index
    %c96_49 = arith.constant 96 : index
    %c0_50 = arith.constant 0 : index
    %167 = vector.load %arg2[%c1_48, %c96_49, %c0_50] : memref<2x168x128xf32, #tpu.memory_space<vmem>>, vector<1x64x32xf32>
    %168 = vector.shape_cast %167 : vector<1x64x32xf32> to vector<64x32xf32>
    %169 = arith.truncf %168 : vector<64x32xf32> to vector<64x32xbf16>
    %c1_51 = arith.constant 1 : index
    %c160_52 = arith.constant 160 : index
    %c0_53 = arith.constant 0 : index
    %170 = vector.load %arg2[%c1_51, %c160_52, %c0_53] : memref<2x168x128xf32, #tpu.memory_space<vmem>>, vector<1x8x128xf32>
    %171 = vector.shape_cast %170 : vector<1x8x128xf32> to vector<8x128xf32>
    %172 = vector.extract_strided_slice %171 {offsets = [0, 0], sizes = [1, 32], strides = [1, 1]} : vector<8x128xf32> to vector<1x32xf32>
    %173 = vector.extract_strided_slice %171 {offsets = [0, 32], sizes = [1, 32], strides = [1, 1]} : vector<8x128xf32> to vector<1x32xf32>
    %174 = vector.extract_strided_slice %171 {offsets = [0, 64], sizes = [1, 32], strides = [1, 1]} : vector<8x128xf32> to vector<1x32xf32>
    %175 = vector.extract_strided_slice %171 {offsets = [0, 96], sizes = [1, 32], strides = [1, 1]} : vector<8x128xf32> to vector<1x32xf32>
    %176 = vector.extract_strided_slice %171 {offsets = [1, 0], sizes = [1, 96], strides = [1, 1]} : vector<8x128xf32> to vector<1x96xf32>
    %177 = vector.extract_strided_slice %171 {offsets = [1, 96], sizes = [1, 32], strides = [1, 1]} : vector<8x128xf32> to vector<1x32xf32>
    %178 = vector.extract_strided_slice %171 {offsets = [2, 0], sizes = [1, 64], strides = [1, 1]} : vector<8x128xf32> to vector<1x64xf32>
    %179 = vector.extract_strided_slice %171 {offsets = [2, 64], sizes = [1, 32], strides = [1, 1]} : vector<8x128xf32> to vector<1x32xf32>
    %cst_54 = arith.constant dense<0.000000e+00> : vector<16xf32>
    %180 = vector.multi_reduction <add>, %157, %cst_54 [1] : vector<16x32xf32> to vector<16xf32>
    %181 = vector.shape_cast %180 : vector<16xf32> to vector<16x1xf32>
    %cst_55 = arith.constant 3.200000e+01 : f32
    %182 = vector.broadcast %cst_55 : f32 to vector<16x1xf32>
    %183 = arith.divf %181, %182 : vector<16x1xf32>
    %184 = vector.broadcast %183 : vector<16x1xf32> to vector<16x32xf32>
    %185 = arith.subf %157, %184 : vector<16x32xf32>
    %186 = arith.mulf %185, %185 : vector<16x32xf32>
    %cst_56 = arith.constant dense<0.000000e+00> : vector<16xf32>
    %187 = vector.multi_reduction <add>, %186, %cst_56 [1] : vector<16x32xf32> to vector<16xf32>
    %188 = vector.shape_cast %187 : vector<16xf32> to vector<16x1xf32>
    %cst_57 = arith.constant 3.200000e+01 : f32
    %189 = vector.broadcast %cst_57 : f32 to vector<16x1xf32>
    %190 = arith.divf %188, %189 : vector<16x1xf32>
    %191 = vector.broadcast %183 : vector<16x1xf32> to vector<16x32xf32>
    %192 = arith.subf %157, %191 : vector<16x32xf32>
    %cst_58 = arith.constant 9.99999974E-6 : f32
    %193 = vector.broadcast %cst_58 : f32 to vector<16x1xf32>
    %194 = arith.addf %190, %193 : vector<16x1xf32>
    %195 = math.rsqrt %194 : vector<16x1xf32>
    %196 = vector.broadcast %195 : vector<16x1xf32> to vector<16x32xf32>
    %197 = arith.mulf %192, %196 : vector<16x32xf32>
    %198 = vector.broadcast %172 : vector<1x32xf32> to vector<16x32xf32>
    %199 = arith.mulf %197, %198 : vector<16x32xf32>
    %200 = vector.broadcast %173 : vector<1x32xf32> to vector<16x32xf32>
    %201 = arith.addf %199, %200 : vector<16x32xf32>
    %202 = arith.addf %201, %1 : vector<16x32xf32>
    %203 = arith.truncf %202 : vector<16x32xf32> to vector<16x32xbf16>
    %cst_59 = arith.constant dense<0.000000e+00> : vector<16x96xf32>
    %204 = tpu.matmul %203, %160, %cst_59 {dimension_numbers = #tpu.dot_dimension_numbers<[1], [0], [0], [1], [0, 0, 1, 1], [], []>} : vector<16x32xbf16>, vector<32x96xbf16>, vector<16x96xf32> -> vector<16x96xf32>
    %205 = vector.broadcast %176 : vector<1x96xf32> to vector<16x96xf32>
    %206 = arith.addf %204, %205 : vector<16x96xf32>
    %207 = vector.extract_strided_slice %206 {offsets = [0, 0], sizes = [16, 32], strides = [1, 1]} : vector<16x96xf32> to vector<16x32xf32>
    %208 = arith.truncf %207 : vector<16x32xf32> to vector<16x32xbf16>
    %209 = vector.extract_strided_slice %206 {offsets = [0, 32], sizes = [16, 32], strides = [1, 1]} : vector<16x96xf32> to vector<16x32xf32>
    %210 = vector.extract_strided_slice %206 {offsets = [0, 64], sizes = [16, 32], strides = [1, 1]} : vector<16x96xf32> to vector<16x32xf32>
    %211 = tpu.concatenate %209, %209, %209, %209 in 0 : vector<16x32xf32>, vector<16x32xf32>, vector<16x32xf32>, vector<16x32xf32> -> vector<64x32xf32>
    %212 = arith.truncf %211 : vector<64x32xf32> to vector<64x32xbf16>
    %213 = arith.mulf %212, %48 : vector<64x32xbf16>
    %214 = tpu.concatenate %210, %210, %210, %210 in 0 : vector<16x32xf32>, vector<16x32xf32>, vector<16x32xf32>, vector<16x32xf32> -> vector<64x32xf32>
    %215 = arith.truncf %214 : vector<64x32xf32> to vector<64x32xbf16>
    %216 = arith.mulf %215, %48 : vector<64x32xbf16>
    %cst_60 = arith.constant dense<0.000000e+00> : vector<16x64xf32>
    %217 = tpu.matmul %208, %213, %cst_60 {dimension_numbers = #tpu.dot_dimension_numbers<[1], [1], [0], [0], [0, 0, 1, 0], [], []>} : vector<16x32xbf16>, vector<64x32xbf16>, vector<16x64xf32> -> vector<16x64xf32>
    %218 = arith.select %35, %217, %38 : vector<16x64xi1>, vector<16x64xf32>
    %cst_61 = arith.constant dense<0xFF800000> : vector<16xf32>
    %219 = vector.multi_reduction <maximumf>, %218, %cst_61 [1] : vector<16x64xf32> to vector<16xf32>
    %220 = vector.shape_cast %219 : vector<16xf32> to vector<16x1xf32>
    %221 = vector.broadcast %220 : vector<16x1xf32> to vector<16x64xf32>
    %222 = arith.subf %218, %221 : vector<16x64xf32>
    %223 = math.exp %222 : vector<16x64xf32>
    %224 = arith.truncf %223 : vector<16x64xf32> to vector<16x64xbf16>
    %cst_62 = arith.constant dense<0.000000e+00> : vector<16x32xf32>
    %225 = tpu.matmul %224, %216, %cst_62 {dimension_numbers = #tpu.dot_dimension_numbers<[1], [0], [0], [1], [0, 0, 1, 1], [], []>} : vector<16x64xbf16>, vector<64x32xbf16>, vector<16x32xf32> -> vector<16x32xf32>
    %cst_63 = arith.constant dense<0.000000e+00> : vector<16x32xf32>
    %226 = tpu.matmul %224, %48, %cst_63 {dimension_numbers = #tpu.dot_dimension_numbers<[1], [0], [0], [1], [0, 0, 1, 1], [], []>} : vector<16x64xbf16>, vector<64x32xbf16>, vector<16x32xf32> -> vector<16x32xf32>
    %227 = tpu.reciprocal %226 {approx = true} : vector<16x32xf32> -> vector<16x32xf32>
    %228 = arith.mulf %225, %227 : vector<16x32xf32>
    %229 = arith.truncf %228 : vector<16x32xf32> to vector<16x32xbf16>
    %cst_64 = arith.constant dense<0.000000e+00> : vector<16x32xf32>
    %230 = tpu.matmul %229, %163, %cst_64 {dimension_numbers = #tpu.dot_dimension_numbers<[1], [0], [0], [1], [0, 0, 1, 1], [], []>} : vector<16x32xbf16>, vector<32x32xbf16>, vector<16x32xf32> -> vector<16x32xf32>
    %231 = vector.broadcast %177 : vector<1x32xf32> to vector<16x32xf32>
    %232 = arith.addf %230, %231 : vector<16x32xf32>
    %233 = arith.addf %157, %232 : vector<16x32xf32>
    %cst_65 = arith.constant dense<0.000000e+00> : vector<16xf32>
    %234 = vector.multi_reduction <add>, %233, %cst_65 [1] : vector<16x32xf32> to vector<16xf32>
    %235 = vector.shape_cast %234 : vector<16xf32> to vector<16x1xf32>
    %cst_66 = arith.constant 3.200000e+01 : f32
    %236 = vector.broadcast %cst_66 : f32 to vector<16x1xf32>
    %237 = arith.divf %235, %236 : vector<16x1xf32>
    %238 = vector.broadcast %237 : vector<16x1xf32> to vector<16x32xf32>
    %239 = arith.subf %233, %238 : vector<16x32xf32>
    %240 = arith.mulf %239, %239 : vector<16x32xf32>
    %cst_67 = arith.constant dense<0.000000e+00> : vector<16xf32>
    %241 = vector.multi_reduction <add>, %240, %cst_67 [1] : vector<16x32xf32> to vector<16xf32>
    %242 = vector.shape_cast %241 : vector<16xf32> to vector<16x1xf32>
    %cst_68 = arith.constant 3.200000e+01 : f32
    %243 = vector.broadcast %cst_68 : f32 to vector<16x1xf32>
    %244 = arith.divf %242, %243 : vector<16x1xf32>
    %245 = vector.broadcast %237 : vector<16x1xf32> to vector<16x32xf32>
    %246 = arith.subf %233, %245 : vector<16x32xf32>
    %cst_69 = arith.constant 9.99999974E-6 : f32
    %247 = vector.broadcast %cst_69 : f32 to vector<16x1xf32>
    %248 = arith.addf %244, %247 : vector<16x1xf32>
    %249 = math.rsqrt %248 : vector<16x1xf32>
    %250 = vector.broadcast %249 : vector<16x1xf32> to vector<16x32xf32>
    %251 = arith.mulf %246, %250 : vector<16x32xf32>
    %252 = vector.broadcast %174 : vector<1x32xf32> to vector<16x32xf32>
    %253 = arith.mulf %251, %252 : vector<16x32xf32>
    %254 = vector.broadcast %175 : vector<1x32xf32> to vector<16x32xf32>
    %255 = arith.addf %253, %254 : vector<16x32xf32>
    %256 = arith.truncf %255 : vector<16x32xf32> to vector<16x32xbf16>
    %cst_70 = arith.constant dense<0.000000e+00> : vector<16x64xf32>
    %257 = tpu.matmul %256, %166, %cst_70 {dimension_numbers = #tpu.dot_dimension_numbers<[1], [0], [0], [1], [0, 0, 1, 1], [], []>} : vector<16x32xbf16>, vector<32x64xbf16>, vector<16x64xf32> -> vector<16x64xf32>
    %258 = vector.broadcast %178 : vector<1x64xf32> to vector<16x64xf32>
    %259 = arith.addf %257, %258 : vector<16x64xf32>
    %cst_71 = arith.constant 0.000000e+00 : f32
    %260 = vector.broadcast %cst_71 : f32 to vector<16x64xf32>
    %261 = arith.maximumf %259, %260 : vector<16x64xf32>
    %262 = arith.truncf %261 : vector<16x64xf32> to vector<16x64xbf16>
    %cst_72 = arith.constant dense<0.000000e+00> : vector<16x32xf32>
    %263 = tpu.matmul %262, %169, %cst_72 {dimension_numbers = #tpu.dot_dimension_numbers<[1], [0], [0], [1], [0, 0, 1, 1], [], []>} : vector<16x64xbf16>, vector<64x32xbf16>, vector<16x32xf32> -> vector<16x32xf32>
    %264 = vector.broadcast %179 : vector<1x32xf32> to vector<16x32xf32>
    %265 = arith.addf %263, %264 : vector<16x32xf32>
    %266 = arith.addf %233, %265 : vector<16x32xf32>
    %c0_73 = arith.constant 0 : index
    %c0_74 = arith.constant 0 : index
    %267 = vector.load %arg3[%c0_73, %c0_74] : memref<16x32xf32, #tpu.memory_space<vmem>>, vector<16x32xf32>
    tpu.vector_store %arg3[%c0_73, %c0_74], %266 {strides = array<i32>} : memref<16x32xf32, #tpu.memory_space<vmem>>, vector<16x32xf32>,
    return
  }
}

</mosaic_0001>

<llo_original>
// kernel: decoder_forward.1
$region0: #{decoder_forward.1}
  #allocation0 [shape = 'u32[]', space=smem, size = 0x4, offset = 0x4, fixed_abs, tag = 'smem constant byte address 0x4 - core index']
  #allocation1 [shape = 'u32[144,128]{1,0:T(1,128)}', space=vmem, size = 0x12000, scoped, tag = 'internal scratch']
  %s0 = inlined_call_operand.vmem [shape: s32[2], index: 0, kind: input, shape index: {}]
  %s1 = inlined_call_operand.vmem [shape: f32[32,32], index: 1, kind: input, shape index: {}]
  %s2 = inlined_call_operand.vmem [shape: f32[2,168,128], index: 2, kind: input, shape index: {}]
  %s3 = inlined_call_operand.hbm [shape: f32[16,32], index: 3, kind: output, shape index: {}]
  %s4 = sld [smem:[#allocation0]]
  $region26: #{decoder_forward.1} parent=0
    _
  %s6 = ssub.s32 1, %s4
  %s7 = scalar_select 0, %s6, %s4
  $region1: #{decoder_forward.1} parent=0
    #allocation2 [shape = 'u8[512]{0}', space=smem, size = 0x200, scoped, tag = 'input window, operand 0, single buffered']
    #allocation3 [shape = 's32[1]{0}', space=sflag, size = 0x4, scoped, tag = 'scoped memory for decoder_forward.1']
    #allocation4 [shape = 's32[1]{0}', space=sflag, size = 0x4, scoped, tag = 'scoped memory for decoder_forward.1']
    #allocation5 [shape = 'u8[8192]{0}', space=vmem, size = 0x2000, scoped, tag = 'output window, operand 0, single buffered']
    %8 = vsyncpa [#allocation4], 0
    %9 = vsyncpa [#allocation3], 0
    // Predicated region
    $region2: #{decoder_forward.1} parent=1 // pred_check
      _
    $region3: #{decoder_forward.1} parent=1 // pred_check_branch
      %11 = sbr.rel (0) target = $region5
    $region4: #{decoder_forward.1} parent=1 // pred_region
      %s13 = ssub.s32 16, 16
      %14 = vsyncadd [#allocation4], %s13
      %s16 = sshll.u32 %s0, 4
      %s17 = int_to_ptr.vmem [resolvable:$true] %s16
      %19 = dma.vmem_to_smem %s17, 16, [#allocation2], [#allocation4]
    $region5: #{decoder_forward.1} parent=1 // pred_fallthru
      _
    // Predicated region
    $region6: #{decoder_forward.1} parent=1 // pred_check
      _
    $region7: #{decoder_forward.1} parent=1 // pred_check_branch
      %21 = sbr.rel (0) target = $region9
    $region8: #{decoder_forward.1} parent=1 // pred_region
      _
    $region9: #{decoder_forward.1} parent=1 // pred_fallthru
      _
    // Predicated region
    $region10: #{decoder_forward.1} parent=1 // pred_check
      _
    $region11: #{decoder_forward.1} parent=1 // pred_check_branch
      %23 = sbr.rel (0) target = $region13
    $region12: #{decoder_forward.1} parent=1 // pred_region
      _
    $region13: #{decoder_forward.1} parent=1 // pred_fallthru
      _
    // Predicated region
    $region14: #{decoder_forward.1} parent=1 // pred_check
      _
    $region15: #{decoder_forward.1} parent=1 // pred_check_branch
      %25 = sbr.rel (0) target = $region17
    $region16: #{decoder_forward.1} parent=1 // pred_region
      %26 = dma.done [#allocation4], 16
    $region17: #{decoder_forward.1} parent=1 // pred_fallthru
      _
    %27 = sfence
    %v29 = vld [vmem:[%s1] sm:$0xff]
    %v30 = vld [vmem:[%s1 + $0x8] sm:$0xff]
    %v31 = vld [vmem:[%s1 + $0x10] sm:$0xff]
    %v32 = vld [vmem:[%s1 + $0x18] sm:$0xff]
    %v33 = vlaneseq
    %v34 = vshrl.u32 %v33, 7
    %v35 = vadd.s32 %v34, 8
    %v36 = vlaneseq
    %v37 = vand.u32 %v36, 127
    %v38 = vand.u32 %v37, 15
    %v39 = vshra.s32 %v34, 3
    %v40 = vshra.s32 %v35, 3
    %v41 = vshra.s32 %v38, 3
    %v42 = vand.u32 %v34, 7
    %v43 = vand.u32 %v35, 7
    %v44 = vand.u32 %v38, 7
    %vm45 = vcmp.eq.s32.totalorder %v39, %v41
    %vm46 = vcmp.eq.s32.totalorder %v40, %v41
    %v47 = vsub.s32 %v42, 2
    %v48 = vsub.s32 %v43, 2
    %vm49 = vcmp.ge.s32.totalorder %v44, %v47
    %vm50 = vcmp.ge.s32.totalorder %v44, %v48
    %v51 = vadd.s32 %v42, 1
    %v52 = vadd.s32 %v43, 1
    %vm53 = vcmp.le.s32.totalorder %v44, %v51
    %vm54 = vcmp.le.s32.totalorder %v44, %v52
    %vm55 = vmand %vm49, %vm53
    %vm56 = vmand %vm50, %vm54
    %vm57 = vcmp.eq.s32.totalorder %v41, 0
    %s58 = sld [smem:[#allocation2]]
    %v59 = vstv %s58
    %v60 = vsel %vm57, %v59, 0
    %vm61 = vcmp.eq.s32.totalorder %v41, 1
    %s62 = sld [smem:[#allocation2 + $0x1]]
    %v63 = vstv %s62
    %v64 = vsel %vm61, %v63, %v60
    %vm65 = vcmp.lt.s32.totalorder %v44, %v64
    %vm66 = vmand %vm45, %vm55
    %vm67 = vmand %vm46, %vm56
    %vm68 = vmand %vm66, %vm65
    %vm69 = vmand %vm67, %vm65
    %v70 = vsel %vm45, -1e+15, -1e+30
    %v71 = vsel %vm46, -1e+15, -1e+30
    %v72 = vadd.s32 %v34, 16
    %v73 = vadd.s32 %v34, 24
    %v74 = vadd.s32 %v34, 32
    %v75 = vadd.s32 %v34, 40
    %v76 = vadd.s32 %v34, 48
    %v77 = vadd.s32 %v34, 56
    %v78 = vshra.s32 %v34, 4
    %v79 = vshra.s32 %v35, 4
    %v80 = vshra.s32 %v72, 4
    %v81 = vshra.s32 %v73, 4
    %v82 = vshra.s32 %v74, 4
    %v83 = vshra.s32 %v75, 4
    %v84 = vshra.s32 %v76, 4
    %v85 = vshra.s32 %v77, 4
    %v86 = vshra.s32 %v37, 3
    %vm87 = vcmp.eq.s32.totalorder %v78, %v86
    %vm88 = vcmp.eq.s32.totalorder %v79, %v86
    %vm89 = vcmp.eq.s32.totalorder %v80, %v86
    %vm90 = vcmp.eq.s32.totalorder %v81, %v86
    %vm91 = vcmp.eq.s32.totalorder %v82, %v86
    %vm92 = vcmp.eq.s32.totalorder %v83, %v86
    %vm93 = vcmp.eq.s32.totalorder %v84, %v86
    %vm94 = vcmp.eq.s32.totalorder %v85, %v86
    %v95 = vsel %vm87, 1, 0
    %v96 = vsel %vm88, 1, 0
    %v97 = vsel %vm89, 1, 0
    %v98 = vsel %vm90, 1, 0
    %v99 = vsel %vm91, 1, 0
    %v100 = vsel %vm92, 1, 0
    %v101 = vsel %vm93, 1, 0
    %v102 = vsel %vm94, 1, 0
    %v103 = vcvt.s32.f32 %v95
    %v104 = vcvt.s32.f32 %v96
    %v105 = vcvt.s32.f32 %v97
    %v106 = vcvt.s32.f32 %v98
    %v107 = vcvt.s32.f32 %v99
    %v108 = vcvt.s32.f32 %v100
    %v109 = vcvt.s32.f32 %v101
    %v110 = vcvt.s32.f32 %v102
    %v111 = vpack.c.bf16 %v104, %v103
    %v112 = vpack.c.bf16 %v106, %v105
    %v113 = vpack.c.bf16 %v108, %v107
    %v114 = vpack.c.bf16 %v110, %v109
    %v115 = vld [vmem:[%s2] sm:$0xff]
    %v116 = vld [vmem:[%s2 + $0x8] sm:$0xff]
    %v117 = vld [vmem:[%s2 + $0x10] sm:$0xff]
    %v118 = vld [vmem:[%s2 + $0x18] sm:$0xff]
    %v119 = vpack.c.bf16 %v116, %v115
    %v120 = vpack.c.bf16 %v118, %v117
    %v121 = vld [vmem:[%s2 + $0x20] sm:$0xff]
    %v122 = vld [vmem:[%s2 + $0x28] sm:$0xff]
    %v123 = vld [vmem:[%s2 + $0x30] sm:$0xff]
    %v124 = vld [vmem:[%s2 + $0x38] sm:$0xff]
    %v125 = vpack.c.bf16 %v122, %v121
    %v126 = vpack.c.bf16 %v124, %v123
    %v127 = vld [vmem:[%s2 + $0x40] sm:$0xff]
    %v128 = vld [vmem:[%s2 + $0x48] sm:$0xff]
    %v129 = vld [vmem:[%s2 + $0x50] sm:$0xff]
    %v130 = vld [vmem:[%s2 + $0x58] sm:$0xff]
    %v131 = vpack.c.bf16 %v128, %v127
    %v132 = vpack.c.bf16 %v130, %v129
    %v133 = vld [vmem:[%s2 + $0x60] sm:$0xff]
    %v134 = vld [vmem:[%s2 + $0x68] sm:$0xff]
    %v135 = vld [vmem:[%s2 + $0x70] sm:$0xff]
    %v136 = vld [vmem:[%s2 + $0x78] sm:$0xff]
    %v137 = vld [vmem:[%s2 + $0x80] sm:$0xff]
    %v138 = vld [vmem:[%s2 + $0x88] sm:$0xff]
    %v139 = vld [vmem:[%s2 + $0x90] sm:$0xff]
    %v140 = vld [vmem:[%s2 + $0x98] sm:$0xff]
    %v141 = vpack.c.bf16 %v134, %v133
    %v142 = vpack.c.bf16 %v136, %v135
    %v143 = vpack.c.bf16 %v138, %v137
    %v144 = vpack.c.bf16 %v140, %v139
    %v145 = vld [vmem:[%s2 + $0xa0] sm:$0xff]
    %vm146 = vcmask 261120
    %v147 = vsel %vm146, %v29, 0.0
    %148 = vadd.xlane.f32.xlu0 %v147
    %v149 = vpop.xlane.xlu0 %148
    %v150 = vsel %vm146, %v30, 0.0
    %151 = vadd.xlane.f32.xlu0 %v150
    %v152 = vpop.xlane.xlu0 %151
    %v153 = vrcp.pop 32.0
    %v154 = vmul.f32 %v149, %v153
    %v155 = vmul.f32 %v152, %v153
    %v156 = vsub.f32 %v29, %v154
    %v157 = vsub.f32 %v30, %v155
    %v158 = vmul.f32 %v156, %v156
    %v159 = vmul.f32 %v157, %v157
    %v160 = vsel %vm146, %v158, 0.0
    %161 = vadd.xlane.f32.xlu0 %v160
    %v162 = vpop.xlane.xlu0 %161
    %v163 = vsel %vm146, %v159, 0.0
    %164 = vadd.xlane.f32.xlu0 %v163
    %v165 = vpop.xlane.xlu0 %164
    %v166 = vmul.f32 %v162, %v153
    %v167 = vmul.f32 %v165, %v153
    %v168 = vadd.f32 %v166, 1e-05
    %v169 = vadd.f32 %v167, 1e-05
    %v170 = vrsqrt.pop %v168
    %v171 = vrsqrt.pop %v169
    %v172 = vmul.f32 %v156, %v170
    %v173 = vmul.f32 %v157, %v171
    %v174 = vlaneseq
    %v175 = vshrl.u32 %v174, 7
    %v176 = vsub.s32 0, %v175
    %v177 = vrot.slane %v145, %v176
    %v178 = vmul.f32 %v172, %v177
    %v179 = vmul.f32 %v173, %v177
    %181 = vrot.lane.b32.xlu0 %v177, 96
    %v182 = vpop.permute.xlu0 %181
    %v184 = vadd.f32 %v178, %v182
    %v185 = vadd.f32 %v179, %v182
    %v186 = vadd.f32 %v184, %v31
    %v187 = vadd.f32 %v185, %v32
    %v188 = vpack.c.bf16 %v187, %v186
    %v189 = vlaneseq
    %v190 = vshrl.u32 %v189, 7
    %v191 = vsub.s32 1, %v190
    %v192 = vrot.slane %v145, %v191
    %v194 = vsel %vm146, %v188, 0
    %196 = vmatprep.subr.bf16.mxu0 0
    %197 = vmatpush1.bf16.msra.mxu0 %v119
    %198 = vmatprep.subr.bf16.mxu0 0
    %199 = vmatpush1.bf16.msra.mxu0 %v120
    %200 = vmatprep.subr.bf16.mxu0 0
    %201 = vmatpush1.bf16.msra.mxu0 0
    %202 = vmatprep.subr.bf16.mxu0 0
    %203 = vmatpush1.bf16.msra.mxu0 0
    %204 = vmatprep.subr.bf16.mxu0 0
    %205 = vmatpush1.bf16.msra.mxu0 0
    %206 = vmatprep.subr.bf16.mxu0 0
    %207 = vmatpush1.bf16.msra.mxu0 0
    %208 = vmatprep.subr.bf16.mxu0 0
    %209 = vmatpush1.bf16.msra.mxu0 0
    %210 = vmatprep.subr.bf16.mxu0 0
    %211 = vmatpush1.bf16.msra.mxu0 0
    %212 = vmatprep.subr.bf16.mxu0 0
    %213 = vmatpush1.bf16.msra.mxu0 0
    %214 = vmatprep.subr.bf16.mxu0 0
    %215 = vmatpush1.bf16.msra.mxu0 0
    %216 = vmatprep.subr.bf16.mxu0 0
    %217 = vmatpush1.bf16.msra.mxu0 0
    %218 = vmatprep.subr.bf16.mxu0 0
    %219 = vmatpush1.bf16.msra.mxu0 0
    %220 = vmatprep.subr.bf16.mxu0 0
    %221 = vmatpush1.bf16.msra.mxu0 0
    %222 = vmatprep.subr.bf16.mxu0 0
    %223 = vmatpush1.bf16.msra.mxu0 0
    %224 = vmatprep.subr.bf16.mxu0 0
    %225 = vmatpush1.bf16.msra.mxu0 0
    %226 = vmatprep.subr.bf16.mxu0 0
    %227 = vmatpush1.bf16.msra.mxu0 0
    %228 = vmatprep.mubr.bf16.mxu0 0
    %229 = vmatmul.mubr.bf16.gmra.mrb[0].mxu0 %v194
    %v230 = vpop.f32.mrb[0].mxu0
    %v231 = vadd.f32 %v192, %v230
    %v232 = vpop.f32.mrb[0].mxu0
    %v233 = vpop.f32.mrb[0].mxu0
    %v234 = vadd.f32 %v192, %v233
    %v235 = vpop.f32.mrb[0].mxu0
    %236 = vdwg.mxu0
    %v237 = vpack.c.bf16 %v234, %v231
    %242 = vrot.lane.b32.xlu0 %v111, 32
    %v243 = vpop.permute.xlu0 %242
    %244 = vrot.lane.b32.xlu0 %v112, 32
    %v245 = vpop.permute.xlu0 %244
    %246 = vrot.lane.b32.xlu0 %v113, 32
    %v247 = vpop.permute.xlu0 %246
    %248 = vrot.lane.b32.xlu0 %v114, 32
    %v249 = vpop.permute.xlu0 %248
    %v254 = vmul.bf16 %v237, %v243
    %v255 = vmul.bf16 %v237, %v245
    %v256 = vmul.bf16 %v237, %v247
    %v257 = vmul.bf16 %v237, %v249
    %258 = vrot.lane.b32.xlu0 %v111, 64
    %v259 = vpop.permute.xlu0 %258
    %260 = vrot.lane.b32.xlu0 %v112, 64
    %v261 = vpop.permute.xlu0 %260
    %262 = vrot.lane.b32.xlu0 %v113, 64
    %v263 = vpop.permute.xlu0 %262
    %264 = vrot.lane.b32.xlu0 %v114, 64
    %v265 = vpop.permute.xlu0 %264
    %v270 = vmul.bf16 %v237, %v259
    %v271 = vmul.bf16 %v237, %v261
    %v272 = vmul.bf16 %v237, %v263
    %v273 = vmul.bf16 %v237, %v265
    %278 = vrot.lane.b32.xlu0 %v254, 96
    %v279 = vpop.permute.xlu0 %278
    %280 = vrot.lane.b32.xlu0 %v255, 96
    %v281 = vpop.permute.xlu0 %280
    %282 = vrot.lane.b32.xlu0 %v256, 96
    %v283 = vpop.permute.xlu0 %282
    %284 = vrot.lane.b32.xlu0 %v257, 96
    %v285 = vpop.permute.xlu0 %284
    %v287 = vsel %vm146, %v237, 0
    %v290 = vsel %vm146, %v279, 0
    %v293 = vsel %vm146, %v281, 0
    %v296 = vsel %vm146, %v283, 0
    %v299 = vsel %vm146, %v285, 0
    %301 = vmatprep.subr.bf16.mxu0 0
    %302 = vmatpush1.bf16.xpose.msra.mxu0 %v290
    %303 = vmatprep.subr.bf16.mxu0 0
    %304 = vmatpush1.bf16.xpose.msra.mxu0 %v293
    %305 = vmatprep.subr.bf16.mxu0 0
    %306 = vmatpush1.bf16.xpose.msra.mxu0 %v296
    %307 = vmatprep.subr.bf16.mxu0 0
    %308 = vmatpush1.bf16.xpose.msra.mxu0 %v299
    %309 = vmatprep.subr.bf16.mxu0 0
    %310 = vmatpush1.bf16.xpose.msra.mxu0 0
    %311 = vmatprep.subr.bf16.mxu0 0
    %312 = vmatpush1.bf16.xpose.msra.mxu0 0
    %313 = vmatprep.subr.bf16.mxu0 0
    %314 = vmatpush1.bf16.xpose.msra.mxu0 0
    %315 = vmatprep.subr.bf16.mxu0 0
    %316 = vmatpush1.bf16.xpose.msra.mxu0 0
    %317 = vmatprep.subr.bf16.mxu0 0
    %318 = vmatpush1.bf16.xpose.msra.mxu0 0
    %319 = vmatprep.subr.bf16.mxu0 0
    %320 = vmatpush1.bf16.xpose.msra.mxu0 0
    %321 = vmatprep.subr.bf16.mxu0 0
    %322 = vmatpush1.bf16.xpose.msra.mxu0 0
    %323 = vmatprep.subr.bf16.mxu0 0
    %324 = vmatpush1.bf16.xpose.msra.mxu0 0
    %325 = vmatprep.subr.bf16.mxu0 0
    %326 = vmatpush1.bf16.xpose.msra.mxu0 0
    %327 = vmatprep.subr.bf16.mxu0 0
    %328 = vmatpush1.bf16.xpose.msra.mxu0 0
    %329 = vmatprep.subr.bf16.mxu0 0
    %330 = vmatpush1.bf16.xpose.msra.mxu0 0
    %331 = vmatprep.subr.bf16.mxu0 0
    %332 = vmatpush1.bf16.xpose.msra.mxu0 0
    %333 = vmatprep.mubr.bf16.mxu0 0
    %334 = vmatmul.mubr.bf16.gmra.mrb[0].mxu0 %v287
    %v335 = vpop.f32.mrb[0].mxu0
    %v336 = vadd.f32 0.0, %v335
    %v337 = vpop.f32.mrb[0].mxu0
    %v338 = vpop.f32.mrb[0].mxu0
    %v339 = vadd.f32 0.0, %v338
    %v340 = vpop.f32.mrb[0].mxu0
    %341 = vdwg.mxu0
    %v342 = vsel %vm68, %v336, %v70
    %v343 = vsel %vm69, %v339, %v71
    %vm344 = vcmask 523264
    %v345 = vsel %vm344, %v342, -inf
    %346 = vmax.xlane.f32.xlu0 %v345
    %v347 = vpop.xlane.xlu0 %346
    %v348 = vsel %vm344, %v343, -inf
    %349 = vmax.xlane.f32.xlu0 %v348
    %v350 = vpop.xlane.xlu0 %349
    %v351 = vsub.f32 %v342, %v347
    %v352 = vsub.f32 %v343, %v350
    %v353 = vmul.f32 %v351, 1.442695
    %v354 = vpow.pop %v353
    %v355 = vmul.f32 %v352, 1.442695
    %v356 = vpow.pop %v355
    %v357 = vpack.c.bf16 %v356, %v354
    %362 = vrot.lane.b32.xlu0 %v270, 64
    %v363 = vpop.permute.xlu0 %362
    %364 = vrot.lane.b32.xlu0 %v271, 64
    %v365 = vpop.permute.xlu0 %364
    %366 = vrot.lane.b32.xlu0 %v272, 64
    %v367 = vpop.permute.xlu0 %366
    %368 = vrot.lane.b32.xlu0 %v273, 64
    %v369 = vpop.permute.xlu0 %368
    %v375 = vsel %vm344, %v357, 0
    %377 = vmatprep.subr.bf16.mxu0 0
    %378 = vmatpush1.bf16.msra.mxu0 %v363
    %379 = vmatprep.subr.bf16.mxu0 0
    %380 = vmatpush1.bf16.msra.mxu0 %v365
    %381 = vmatprep.subr.bf16.mxu0 0
    %382 = vmatpush1.bf16.msra.mxu0 %v367
    %383 = vmatprep.subr.bf16.mxu0 0
    %384 = vmatpush1.bf16.msra.mxu0 %v369
    %385 = vmatprep.subr.bf16.mxu0 0
    %386 = vmatpush1.bf16.msra.mxu0 0
    %387 = vmatprep.subr.bf16.mxu0 0
    %388 = vmatpush1.bf16.msra.mxu0 0
    %389 = vmatprep.subr.bf16.mxu0 0
    %390 = vmatpush1.bf16.msra.mxu0 0
    %391 = vmatprep.subr.bf16.mxu0 0
    %392 = vmatpush1.bf16.msra.mxu0 0
    %393 = vmatprep.subr.bf16.mxu0 0
    %394 = vmatpush1.bf16.msra.mxu0 0
    %395 = vmatprep.subr.bf16.mxu0 0
    %396 = vmatpush1.bf16.msra.mxu0 0
    %397 = vmatprep.subr.bf16.mxu0 0
    %398 = vmatpush1.bf16.msra.mxu0 0
    %399 = vmatprep.subr.bf16.mxu0 0
    %400 = vmatpush1.bf16.msra.mxu0 0
    %401 = vmatprep.subr.bf16.mxu0 0
    %402 = vmatpush1.bf16.msra.mxu0 0
    %403 = vmatprep.subr.bf16.mxu0 0
    %404 = vmatpush1.bf16.msra.mxu0 0
    %405 = vmatprep.subr.bf16.mxu0 0
    %406 = vmatpush1.bf16.msra.mxu0 0
    %407 = vmatprep.subr.bf16.mxu0 0
    %408 = vmatpush1.bf16.msra.mxu0 0
    %409 = vmatprep.mubr.bf16.mxu0 0
    %410 = vmatmul.mubr.bf16.gmra.mrb[0].mxu0 %v375
    %v411 = vpop.f32.mrb[0].mxu0
    %v412 = vadd.f32 0.0, %v411
    %v413 = vpop.f32.mrb[0].mxu0
    %v414 = vpop.f32.mrb[0].mxu0
    %v415 = vadd.f32 0.0, %v414
    %v416 = vpop.f32.mrb[0].mxu0
    %417 = vdwg.mxu0
    %418 = vmatprep.subr.bf16.mxu0 0
    %419 = vmatpush1.bf16.msra.mxu0 %v111
    %420 = vmatprep.subr.bf16.mxu0 0
    %421 = vmatpush1.bf16.msra.mxu0 %v112
    %422 = vmatprep.subr.bf16.mxu0 0
    %423 = vmatpush1.bf16.msra.mxu0 %v113
    %424 = vmatprep.subr.bf16.mxu0 0
    %425 = vmatpush1.bf16.msra.mxu0 %v114
    %426 = vmatprep.subr.bf16.mxu0 0
    %427 = vmatpush1.bf16.msra.mxu0 0
    %428 = vmatprep.subr.bf16.mxu0 0
    %429 = vmatpush1.bf16.msra.mxu0 0
    %430 = vmatprep.subr.bf16.mxu0 0
    %431 = vmatpush1.bf16.msra.mxu0 0
    %432 = vmatprep.subr.bf16.mxu0 0
    %433 = vmatpush1.bf16.msra.mxu0 0
    %434 = vmatprep.subr.bf16.mxu0 0
    %435 = vmatpush1.bf16.msra.mxu0 0
    %436 = vmatprep.subr.bf16.mxu0 0
    %437 = vmatpush1.bf16.msra.mxu0 0
    %438 = vmatprep.subr.bf16.mxu0 0
    %439 = vmatpush1.bf16.msra.mxu0 0
    %440 = vmatprep.subr.bf16.mxu0 0
    %441 = vmatpush1.bf16.msra.mxu0 0
    %442 = vmatprep.subr.bf16.mxu0 0
    %443 = vmatpush1.bf16.msra.mxu0 0
    %444 = vmatprep.subr.bf16.mxu0 0
    %445 = vmatpush1.bf16.msra.mxu0 0
    %446 = vmatprep.subr.bf16.mxu0 0
    %447 = vmatpush1.bf16.msra.mxu0 0
    %448 = vmatprep.subr.bf16.mxu0 0
    %449 = vmatpush1.bf16.msra.mxu0 0
    %450 = vmatprep.mubr.bf16.mxu0 0
    %451 = vmatmul.mubr.bf16.gmra.mrb[0].mxu0 %v375
    %v452 = vpop.f32.mrb[0].mxu0
    %v453 = vadd.f32 0.0, %v452
    %v454 = vpop.f32.mrb[0].mxu0
    %v455 = vpop.f32.mrb[0].mxu0
    %v456 = vadd.f32 0.0, %v455
    %v457 = vpop.f32.mrb[0].mxu0
    %458 = vdwg.mxu0
    %v459 = vrcp.pop %v453
    %v460 = vrcp.pop %v456
    %v461 = vmul.f32 %v412, %v459
    %v462 = vmul.f32 %v415, %v460
    %v463 = vpack.c.bf16 %v462, %v461
    %465 = vrot.lane.b32.xlu0 %v192, 32
    %v466 = vpop.permute.xlu0 %465
    %v469 = vsel %vm146, %v463, 0
    %471 = vmatprep.subr.bf16.mxu0 0
    %472 = vmatpush1.bf16.msra.mxu0 %v125
    %473 = vmatprep.subr.bf16.mxu0 0
    %474 = vmatpush1.bf16.msra.mxu0 %v126
    %475 = vmatprep.subr.bf16.mxu0 0
    %476 = vmatpush1.bf16.msra.mxu0 0
    %477 = vmatprep.subr.bf16.mxu0 0
    %478 = vmatpush1.bf16.msra.mxu0 0
    %479 = vmatprep.subr.bf16.mxu0 0
    %480 = vmatpush1.bf16.msra.mxu0 0
    %481 = vmatprep.subr.bf16.mxu0 0
    %482 = vmatpush1.bf16.msra.mxu0 0
    %483 = vmatprep.subr.bf16.mxu0 0
    %484 = vmatpush1.bf16.msra.mxu0 0
    %485 = vmatprep.subr.bf16.mxu0 0
    %486 = vmatpush1.bf16.msra.mxu0 0
    %487 = vmatprep.subr.bf16.mxu0 0
    %488 = vmatpush1.bf16.msra.mxu0 0
    %489 = vmatprep.subr.bf16.mxu0 0
    %490 = vmatpush1.bf16.msra.mxu0 0
    %491 = vmatprep.subr.bf16.mxu0 0
    %492 = vmatpush1.bf16.msra.mxu0 0
    %493 = vmatprep.subr.bf16.mxu0 0
    %494 = vmatpush1.bf16.msra.mxu0 0
    %495 = vmatprep.subr.bf16.mxu0 0
    %496 = vmatpush1.bf16.msra.mxu0 0
    %497 = vmatprep.subr.bf16.mxu0 0
    %498 = vmatpush1.bf16.msra.mxu0 0
    %499 = vmatprep.subr.bf16.mxu0 0
    %500 = vmatpush1.bf16.msra.mxu0 0
    %501 = vmatprep.subr.bf16.mxu0 0
    %502 = vmatpush1.bf16.msra.mxu0 0
    %503 = vmatprep.mubr.bf16.mxu0 0
    %504 = vmatmul.mubr.bf16.gmra.mrb[0].mxu0 %v469
    %v505 = vpop.f32.mrb[0].mxu0
    %v506 = vadd.f32 %v466, %v505
    %v507 = vpop.f32.mrb[0].mxu0
    %v508 = vpop.f32.mrb[0].mxu0
    %v509 = vadd.f32 %v466, %v508
    %v510 = vpop.f32.mrb[0].mxu0
    %511 = vdwg.mxu0
    %v512 = vadd.f32 %v29, %v506
    %v513 = vadd.f32 %v30, %v509
    %v514 = vsel %vm146, %v512, 0.0
    %515 = vadd.xlane.f32.xlu0 %v514
    %v516 = vpop.xlane.xlu0 %515
    %v517 = vsel %vm146, %v513, 0.0
    %518 = vadd.xlane.f32.xlu0 %v517
    %v519 = vpop.xlane.xlu0 %518
    %v520 = vmul.f32 %v516, %v153
    %v521 = vmul.f32 %v519, %v153
    %v522 = vsub.f32 %v512, %v520
    %v523 = vsub.f32 %v513, %v521
    %v524 = vmul.f32 %v522, %v522
    %v525 = vmul.f32 %v523, %v523
    %v526 = vsel %vm146, %v524, 0.0
    %527 = vadd.xlane.f32.xlu0 %v526
    %v528 = vpop.xlane.xlu0 %527
    %v529 = vsel %vm146, %v525, 0.0
    %530 = vadd.xlane.f32.xlu0 %v529
    %v531 = vpop.xlane.xlu0 %530
    %v532 = vmul.f32 %v528, %v153
    %v533 = vmul.f32 %v531, %v153
    %v534 = vadd.f32 %v532, 1e-05
    %v535 = vadd.f32 %v533, 1e-05
    %v536 = vrsqrt.pop %v534
    %v537 = vrsqrt.pop %v535
    %v538 = vmul.f32 %v522, %v536
    %v539 = vmul.f32 %v523, %v537
    %540 = vrot.lane.b32.xlu0 %v177, 64
    %v541 = vpop.permute.xlu0 %540
    %v543 = vmul.f32 %v538, %v541
    %v544 = vmul.f32 %v539, %v541
    %545 = vrot.lane.b32.xlu0 %v177, 32
    %v546 = vpop.permute.xlu0 %545
    %v548 = vadd.f32 %v543, %v546
    %v549 = vadd.f32 %v544, %v546
    %v550 = vpack.c.bf16 %v549, %v548
    %v551 = vlaneseq
    %v552 = vshrl.u32 %v551, 7
    %v553 = vsub.s32 2, %v552
    %v554 = vrot.slane %v145, %v553
    %v556 = vsel %vm146, %v550, 0
    %558 = vmatprep.subr.bf16.mxu0 0
    %559 = vmatpush1.bf16.msra.mxu0 %v131
    %560 = vmatprep.subr.bf16.mxu0 0
    %561 = vmatpush1.bf16.msra.mxu0 %v132
    %562 = vmatprep.subr.bf16.mxu0 0
    %563 = vmatpush1.bf16.msra.mxu0 0
    %564 = vmatprep.subr.bf16.mxu0 0
    %565 = vmatpush1.bf16.msra.mxu0 0
    %566 = vmatprep.subr.bf16.mxu0 0
    %567 = vmatpush1.bf16.msra.mxu0 0
    %568 = vmatprep.subr.bf16.mxu0 0
    %569 = vmatpush1.bf16.msra.mxu0 0
    %570 = vmatprep.subr.bf16.mxu0 0
    %571 = vmatpush1.bf16.msra.mxu0 0
    %572 = vmatprep.subr.bf16.mxu0 0
    %573 = vmatpush1.bf16.msra.mxu0 0
    %574 = vmatprep.subr.bf16.mxu0 0
    %575 = vmatpush1.bf16.msra.mxu0 0
    %576 = vmatprep.subr.bf16.mxu0 0
    %577 = vmatpush1.bf16.msra.mxu0 0
    %578 = vmatprep.subr.bf16.mxu0 0
    %579 = vmatpush1.bf16.msra.mxu0 0
    %580 = vmatprep.subr.bf16.mxu0 0
    %581 = vmatpush1.bf16.msra.mxu0 0
    %582 = vmatprep.subr.bf16.mxu0 0
    %583 = vmatpush1.bf16.msra.mxu0 0
    %584 = vmatprep.subr.bf16.mxu0 0
    %585 = vmatpush1.bf16.msra.mxu0 0
    %586 = vmatprep.subr.bf16.mxu0 0
    %587 = vmatpush1.bf16.msra.mxu0 0
    %588 = vmatprep.subr.bf16.mxu0 0
    %589 = vmatpush1.bf16.msra.mxu0 0
    %590 = vmatprep.mubr.bf16.mxu0 0
    %591 = vmatmul.mubr.bf16.gmra.mrb[0].mxu0 %v556
    %v592 = vpop.f32.mrb[0].mxu0
    %v593 = vadd.f32 %v554, %v592
    %v594 = vpop.f32.mrb[0].mxu0
    %v595 = vpop.f32.mrb[0].mxu0
    %v596 = vadd.f32 %v554, %v595
    %v597 = vpop.f32.mrb[0].mxu0
    %598 = vdwg.mxu0
    %v599 = vmax.f32 %v593, 0.0
    %v600 = vmax.f32 %v596, 0.0
    %v601 = vpack.c.bf16 %v600, %v599
    %603 = vrot.lane.b32.xlu0 %v554, 64
    %v604 = vpop.permute.xlu0 %603
    %v607 = vsel %vm344, %v601, 0
    %609 = vmatprep.subr.bf16.mxu0 0
    %610 = vmatpush1.bf16.msra.mxu0 %v141
    %611 = vmatprep.subr.bf16.mxu0 0
    %612 = vmatpush1.bf16.msra.mxu0 %v142
    %613 = vmatprep.subr.bf16.mxu0 0
    %614 = vmatpush1.bf16.msra.mxu0 %v143
    %615 = vmatprep.subr.bf16.mxu0 0
    %616 = vmatpush1.bf16.msra.mxu0 %v144
    %617 = vmatprep.subr.bf16.mxu0 0
    %618 = vmatpush1.bf16.msra.mxu0 0
    %619 = vmatprep.subr.bf16.mxu0 0
    %620 = vmatpush1.bf16.msra.mxu0 0
    %621 = vmatprep.subr.bf16.mxu0 0
    %622 = vmatpush1.bf16.msra.mxu0 0
    %623 = vmatprep.subr.bf16.mxu0 0
    %624 = vmatpush1.bf16.msra.mxu0 0
    %625 = vmatprep.subr.bf16.mxu0 0
    %626 = vmatpush1.bf16.msra.mxu0 0
    %627 = vmatprep.subr.bf16.mxu0 0
    %628 = vmatpush1.bf16.msra.mxu0 0
    %629 = vmatprep.subr.bf16.mxu0 0
    %630 = vmatpush1.bf16.msra.mxu0 0
    %631 = vmatprep.subr.bf16.mxu0 0
    %632 = vmatpush1.bf16.msra.mxu0 0
    %633 = vmatprep.subr.bf16.mxu0 0
    %634 = vmatpush1.bf16.msra.mxu0 0
    %635 = vmatprep.subr.bf16.mxu0 0
    %636 = vmatpush1.bf16.msra.mxu0 0
    %637 = vmatprep.subr.bf16.mxu0 0
    %638 = vmatpush1.bf16.msra.mxu0 0
    %639 = vmatprep.subr.bf16.mxu0 0
    %640 = vmatpush1.bf16.msra.mxu0 0
    %641 = vmatprep.mubr.bf16.mxu0 0
    %642 = vmatmul.mubr.bf16.gmra.mrb[0].mxu0 %v607
    %v643 = vpop.f32.mrb[0].mxu0
    %v644 = vadd.f32 %v604, %v643
    %v645 = vpop.f32.mrb[0].mxu0
    %v646 = vpop.f32.mrb[0].mxu0
    %v647 = vadd.f32 %v604, %v646
    %v648 = vpop.f32.mrb[0].mxu0
    %649 = vdwg.mxu0
    %v650 = vadd.f32 %v512, %v644
    %v651 = vadd.f32 %v513, %v647
    %s652 = scalar_lea.vmem %s2, 168
    %v653 = vld [vmem:[%s652] sm:$0xff]
    %v654 = vld [vmem:[%s652 + $0x8] sm:$0xff]
    %v655 = vld [vmem:[%s652 + $0x10] sm:$0xff]
    %v656 = vld [vmem:[%s652 + $0x18] sm:$0xff]
    %v657 = vpack.c.bf16 %v654, %v653
    %v658 = vpack.c.bf16 %v656, %v655
    %v659 = vld [vmem:[%s652 + $0x20] sm:$0xff]
    %v660 = vld [vmem:[%s652 + $0x28] sm:$0xff]
    %v661 = vld [vmem:[%s652 + $0x30] sm:$0xff]
    %v662 = vld [vmem:[%s652 + $0x38] sm:$0xff]
    %v663 = vpack.c.bf16 %v660, %v659
    %v664 = vpack.c.bf16 %v662, %v661
    %v665 = vld [vmem:[%s652 + $0x40] sm:$0xff]
    %v666 = vld [vmem:[%s652 + $0x48] sm:$0xff]
    %v667 = vld [vmem:[%s652 + $0x50] sm:$0xff]
    %v668 = vld [vmem:[%s652 + $0x58] sm:$0xff]
    %v669 = vpack.c.bf16 %v666, %v665
    %v670 = vpack.c.bf16 %v668, %v667
    %v671 = vld [vmem:[%s652 + $0x60] sm:$0xff]
    %v672 = vld [vmem:[%s652 + $0x68] sm:$0xff]
    %v673 = vld [vmem:[%s652 + $0x70] sm:$0xff]
    %v674 = vld [vmem:[%s652 + $0x78] sm:$0xff]
    %v675 = vld [vmem:[%s652 + $0x80] sm:$0xff]
    %v676 = vld [vmem:[%s652 + $0x88] sm:$0xff]
    %v677 = vld [vmem:[%s652 + $0x90] sm:$0xff]
    %v678 = vld [vmem:[%s652 + $0x98] sm:$0xff]
    %v679 = vpack.c.bf16 %v672, %v671
    %v680 = vpack.c.bf16 %v674, %v673
    %v681 = vpack.c.bf16 %v676, %v675
    %v682 = vpack.c.bf16 %v678, %v677
    %v683 = vld [vmem:[%s652 + $0xa0] sm:$0xff]
    %v684 = vsel %vm146, %v650, 0.0
    %685 = vadd.xlane.f32.xlu0 %v684
    %v686 = vpop.xlane.xlu0 %685
    %v687 = vsel %vm146, %v651, 0.0
    %688 = vadd.xlane.f32.xlu0 %v687
    %v689 = vpop.xlane.xlu0 %688
    %v690 = vmul.f32 %v686, %v153
    %v691 = vmul.f32 %v689, %v153
    %v692 = vsub.f32 %v650, %v690
    %v693 = vsub.f32 %v651, %v691
    %v694 = vmul.f32 %v692, %v692
    %v695 = vmul.f32 %v693, %v693
    %v696 = vsel %vm146, %v694, 0.0
    %697 = vadd.xlane.f32.xlu0 %v696
    %v698 = vpop.xlane.xlu0 %697
    %v699 = vsel %vm146, %v695, 0.0
    %700 = vadd.xlane.f32.xlu0 %v699
    %v701 = vpop.xlane.xlu0 %700
    %v702 = vmul.f32 %v698, %v153
    %v703 = vmul.f32 %v701, %v153
    %v704 = vadd.f32 %v702, 1e-05
    %v705 = vadd.f32 %v703, 1e-05
    %v706 = vrsqrt.pop %v704
    %v707 = vrsqrt.pop %v705
    %v708 = vmul.f32 %v692, %v706
    %v709 = vmul.f32 %v693, %v707
    %v710 = vlaneseq
    %v711 = vshrl.u32 %v710, 7
    %v712 = vsub.s32 0, %v711
    %v713 = vrot.slane %v683, %v712
    %v714 = vmul.f32 %v708, %v713
    %v715 = vmul.f32 %v709, %v713
    %717 = vrot.lane.b32.xlu0 %v713, 96
    %v718 = vpop.permute.xlu0 %717
    %v720 = vadd.f32 %v714, %v718
    %v721 = vadd.f32 %v715, %v718
    %v722 = vadd.f32 %v720, %v31
    %v723 = vadd.f32 %v721, %v32
    %v724 = vpack.c.bf16 %v723, %v722
    %v725 = vlaneseq
    %v726 = vshrl.u32 %v725, 7
    %v727 = vsub.s32 1, %v726
    %v728 = vrot.slane %v683, %v727
    %v730 = vsel %vm146, %v724, 0
    %732 = vmatprep.subr.bf16.mxu0 0
    %733 = vmatpush1.bf16.msra.mxu0 %v657
    %734 = vmatprep.subr.bf16.mxu0 0
    %735 = vmatpush1.bf16.msra.mxu0 %v658
    %736 = vmatprep.subr.bf16.mxu0 0
    %737 = vmatpush1.bf16.msra.mxu0 0
    %738 = vmatprep.subr.bf16.mxu0 0
    %739 = vmatpush1.bf16.msra.mxu0 0
    %740 = vmatprep.subr.bf16.mxu0 0
    %741 = vmatpush1.bf16.msra.mxu0 0
    %742 = vmatprep.subr.bf16.mxu0 0
    %743 = vmatpush1.bf16.msra.mxu0 0
    %744 = vmatprep.subr.bf16.mxu0 0
    %745 = vmatpush1.bf16.msra.mxu0 0
    %746 = vmatprep.subr.bf16.mxu0 0
    %747 = vmatpush1.bf16.msra.mxu0 0
    %748 = vmatprep.subr.bf16.mxu0 0
    %749 = vmatpush1.bf16.msra.mxu0 0
    %750 = vmatprep.subr.bf16.mxu0 0
    %751 = vmatpush1.bf16.msra.mxu0 0
    %752 = vmatprep.subr.bf16.mxu0 0
    %753 = vmatpush1.bf16.msra.mxu0 0
    %754 = vmatprep.subr.bf16.mxu0 0
    %755 = vmatpush1.bf16.msra.mxu0 0
    %756 = vmatprep.subr.bf16.mxu0 0
    %757 = vmatpush1.bf16.msra.mxu0 0
    %758 = vmatprep.subr.bf16.mxu0 0
    %759 = vmatpush1.bf16.msra.mxu0 0
    %760 = vmatprep.subr.bf16.mxu0 0
    %761 = vmatpush1.bf16.msra.mxu0 0
    %762 = vmatprep.subr.bf16.mxu0 0
    %763 = vmatpush1.bf16.msra.mxu0 0
    %764 = vmatprep.mubr.bf16.mxu0 0
    %765 = vmatmul.mubr.bf16.gmra.mrb[0].mxu0 %v730
    %v766 = vpop.f32.mrb[0].mxu0
    %v767 = vadd.f32 %v728, %v766
    %v768 = vpop.f32.mrb[0].mxu0
    %v769 = vpop.f32.mrb[0].mxu0
    %v770 = vadd.f32 %v728, %v769
    %v771 = vpop.f32.mrb[0].mxu0
    %772 = vdwg.mxu0
    %v773 = vpack.c.bf16 %v770, %v767
    %v774 = vmul.bf16 %v773, %v243
    %v775 = vmul.bf16 %v773, %v245
    %v776 = vmul.bf16 %v773, %v247
    %v777 = vmul.bf16 %v773, %v249
    %v778 = vmul.bf16 %v773, %v259
    %v779 = vmul.bf16 %v773, %v261
    %v780 = vmul.bf16 %v773, %v263
    %v781 = vmul.bf16 %v773, %v265
    %786 = vrot.lane.b32.xlu0 %v774, 96
    %v787 = vpop.permute.xlu0 %786
    %788 = vrot.lane.b32.xlu0 %v775, 96
    %v789 = vpop.permute.xlu0 %788
    %790 = vrot.lane.b32.xlu0 %v776, 96
    %v791 = vpop.permute.xlu0 %790
    %792 = vrot.lane.b32.xlu0 %v777, 96
    %v793 = vpop.permute.xlu0 %792
    %v795 = vsel %vm146, %v773, 0
    %v798 = vsel %vm146, %v787, 0
    %v801 = vsel %vm146, %v789, 0
    %v804 = vsel %vm146, %v791, 0
    %v807 = vsel %vm146, %v793, 0
    %809 = vmatprep.subr.bf16.mxu0 0
    %810 = vmatpush1.bf16.xpose.msra.mxu0 %v798
    %811 = vmatprep.subr.bf16.mxu0 0
    %812 = vmatpush1.bf16.xpose.msra.mxu0 %v801
    %813 = vmatprep.subr.bf16.mxu0 0
    %814 = vmatpush1.bf16.xpose.msra.mxu0 %v804
    %815 = vmatprep.subr.bf16.mxu0 0
    %816 = vmatpush1.bf16.xpose.msra.mxu0 %v807
    %817 = vmatprep.subr.bf16.mxu0 0
    %818 = vmatpush1.bf16.xpose.msra.mxu0 0
    %819 = vmatprep.subr.bf16.mxu0 0
    %820 = vmatpush1.bf16.xpose.msra.mxu0 0
    %821 = vmatprep.subr.bf16.mxu0 0
    %822 = vmatpush1.bf16.xpose.msra.mxu0 0
    %823 = vmatprep.subr.bf16.mxu0 0
    %824 = vmatpush1.bf16.xpose.msra.mxu0 0
    %825 = vmatprep.subr.bf16.mxu0 0
    %826 = vmatpush1.bf16.xpose.msra.mxu0 0
    %827 = vmatprep.subr.bf16.mxu0 0
    %828 = vmatpush1.bf16.xpose.msra.mxu0 0
    %829 = vmatprep.subr.bf16.mxu0 0
    %830 = vmatpush1.bf16.xpose.msra.mxu0 0
    %831 = vmatprep.subr.bf16.mxu0 0
    %832 = vmatpush1.bf16.xpose.msra.mxu0 0
    %833 = vmatprep.subr.bf16.mxu0 0
    %834 = vmatpush1.bf16.xpose.msra.mxu0 0
    %835 = vmatprep.subr.bf16.mxu0 0
    %836 = vmatpush1.bf16.xpose.msra.mxu0 0
    %837 = vmatprep.subr.bf16.mxu0 0
    %838 = vmatpush1.bf16.xpose.msra.mxu0 0
    %839 = vmatprep.subr.bf16.mxu0 0
    %840 = vmatpush1.bf16.xpose.msra.mxu0 0
    %841 = vmatprep.mubr.bf16.mxu0 0
    %842 = vmatmul.mubr.bf16.gmra.mrb[0].mxu0 %v795
    %v843 = vpop.f32.mrb[0].mxu0
    %v844 = vadd.f32 0.0, %v843
    %v845 = vpop.f32.mrb[0].mxu0
    %v846 = vpop.f32.mrb[0].mxu0
    %v847 = vadd.f32 0.0, %v846
    %v848 = vpop.f32.mrb[0].mxu0
    %849 = vdwg.mxu0
    %v850 = vsel %vm68, %v844, %v70
    %v851 = vsel %vm69, %v847, %v71
    %v852 = vsel %vm344, %v850, -inf
    %853 = vmax.xlane.f32.xlu0 %v852
    %v854 = vpop.xlane.xlu0 %853
    %v855 = vsel %vm344, %v851, -inf
    %856 = vmax.xlane.f32.xlu0 %v855
    %v857 = vpop.xlane.xlu0 %856
    %v858 = vsub.f32 %v850, %v854
    %v859 = vsub.f32 %v851, %v857
    %v860 = vmul.f32 %v858, 1.442695
    %v861 = vpow.pop %v860
    %v862 = vmul.f32 %v859, 1.442695
    %v863 = vpow.pop %v862
    %v864 = vpack.c.bf16 %v863, %v861
    %869 = vrot.lane.b32.xlu0 %v778, 64
    %v870 = vpop.permute.xlu0 %869
    %871 = vrot.lane.b32.xlu0 %v779, 64
    %v872 = vpop.permute.xlu0 %871
    %873 = vrot.lane.b32.xlu0 %v780, 64
    %v874 = vpop.permute.xlu0 %873
    %875 = vrot.lane.b32.xlu0 %v781, 64
    %v876 = vpop.permute.xlu0 %875
    %v882 = vsel %vm344, %v864, 0
    %884 = vmatprep.subr.bf16.mxu0 0
    %885 = vmatpush1.bf16.msra.mxu0 %v870
    %886 = vmatprep.subr.bf16.mxu0 0
    %887 = vmatpush1.bf16.msra.mxu0 %v872
    %888 = vmatprep.subr.bf16.mxu0 0
    %889 = vmatpush1.bf16.msra.mxu0 %v874
    %890 = vmatprep.subr.bf16.mxu0 0
    %891 = vmatpush1.bf16.msra.mxu0 %v876
    %892 = vmatprep.subr.bf16.mxu0 0
    %893 = vmatpush1.bf16.msra.mxu0 0
    %894 = vmatprep.subr.bf16.mxu0 0
    %895 = vmatpush1.bf16.msra.mxu0 0
    %896 = vmatprep.subr.bf16.mxu0 0
    %897 = vmatpush1.bf16.msra.mxu0 0
    %898 = vmatprep.subr.bf16.mxu0 0
    %899 = vmatpush1.bf16.msra.mxu0 0
    %900 = vmatprep.subr.bf16.mxu0 0
    %901 = vmatpush1.bf16.msra.mxu0 0
    %902 = vmatprep.subr.bf16.mxu0 0
    %903 = vmatpush1.bf16.msra.mxu0 0
    %904 = vmatprep.subr.bf16.mxu0 0
    %905 = vmatpush1.bf16.msra.mxu0 0
    %906 = vmatprep.subr.bf16.mxu0 0
    %907 = vmatpush1.bf16.msra.mxu0 0
    %908 = vmatprep.subr.bf16.mxu0 0
    %909 = vmatpush1.bf16.msra.mxu0 0
    %910 = vmatprep.subr.bf16.mxu0 0
    %911 = vmatpush1.bf16.msra.mxu0 0
    %912 = vmatprep.subr.bf16.mxu0 0
    %913 = vmatpush1.bf16.msra.mxu0 0
    %914 = vmatprep.subr.bf16.mxu0 0
    %915 = vmatpush1.bf16.msra.mxu0 0
    %916 = vmatprep.mubr.bf16.mxu0 0
    %917 = vmatmul.mubr.bf16.gmra.mrb[0].mxu0 %v882
    %v918 = vpop.f32.mrb[0].mxu0
    %v919 = vadd.f32 0.0, %v918
    %v920 = vpop.f32.mrb[0].mxu0
    %v921 = vpop.f32.mrb[0].mxu0
    %v922 = vadd.f32 0.0, %v921
    %v923 = vpop.f32.mrb[0].mxu0
    %924 = vdwg.mxu0
    %925 = vmatprep.subr.bf16.mxu0 0
    %926 = vmatpush1.bf16.msra.mxu0 %v111
    %927 = vmatprep.subr.bf16.mxu0 0
    %928 = vmatpush1.bf16.msra.mxu0 %v112
    %929 = vmatprep.subr.bf16.mxu0 0
    %930 = vmatpush1.bf16.msra.mxu0 %v113
    %931 = vmatprep.subr.bf16.mxu0 0
    %932 = vmatpush1.bf16.msra.mxu0 %v114
    %933 = vmatprep.subr.bf16.mxu0 0
    %934 = vmatpush1.bf16.msra.mxu0 0
    %935 = vmatprep.subr.bf16.mxu0 0
    %936 = vmatpush1.bf16.msra.mxu0 0
    %937 = vmatprep.subr.bf16.mxu0 0
    %938 = vmatpush1.bf16.msra.mxu0 0
    %939 = vmatprep.subr.bf16.mxu0 0
    %940 = vmatpush1.bf16.msra.mxu0 0
    %941 = vmatprep.subr.bf16.mxu0 0
    %942 = vmatpush1.bf16.msra.mxu0 0
    %943 = vmatprep.subr.bf16.mxu0 0
    %944 = vmatpush1.bf16.msra.mxu0 0
    %945 = vmatprep.subr.bf16.mxu0 0
    %946 = vmatpush1.bf16.msra.mxu0 0
    %947 = vmatprep.subr.bf16.mxu0 0
    %948 = vmatpush1.bf16.msra.mxu0 0
    %949 = vmatprep.subr.bf16.mxu0 0
    %950 = vmatpush1.bf16.msra.mxu0 0
    %951 = vmatprep.subr.bf16.mxu0 0
    %952 = vmatpush1.bf16.msra.mxu0 0
    %953 = vmatprep.subr.bf16.mxu0 0
    %954 = vmatpush1.bf16.msra.mxu0 0
    %955 = vmatprep.subr.bf16.mxu0 0
    %956 = vmatpush1.bf16.msra.mxu0 0
    %957 = vmatprep.mubr.bf16.mxu0 0
    %958 = vmatmul.mubr.bf16.gmra.mrb[0].mxu0 %v882
    %v959 = vpop.f32.mrb[0].mxu0
    %v960 = vadd.f32 0.0, %v959
    %v961 = vpop.f32.mrb[0].mxu0
    %v962 = vpop.f32.mrb[0].mxu0
    %v963 = vadd.f32 0.0, %v962
    %v964 = vpop.f32.mrb[0].mxu0
    %965 = vdwg.mxu0
    %v966 = vrcp.pop %v960
    %v967 = vrcp.pop %v963
    %v968 = vmul.f32 %v919, %v966
    %v969 = vmul.f32 %v922, %v967
    %v970 = vpack.c.bf16 %v969, %v968
    %972 = vrot.lane.b32.xlu0 %v728, 32
    %v973 = vpop.permute.xlu0 %972
    %v976 = vsel %vm146, %v970, 0
    %978 = vmatprep.subr.bf16.mxu0 0
    %979 = vmatpush1.bf16.msra.mxu0 %v663
    %980 = vmatprep.subr.bf16.mxu0 0
    %981 = vmatpush1.bf16.msra.mxu0 %v664
    %982 = vmatprep.subr.bf16.mxu0 0
    %983 = vmatpush1.bf16.msra.mxu0 0
    %984 = vmatprep.subr.bf16.mxu0 0
    %985 = vmatpush1.bf16.msra.mxu0 0
    %986 = vmatprep.subr.bf16.mxu0 0
    %987 = vmatpush1.bf16.msra.mxu0 0
    %988 = vmatprep.subr.bf16.mxu0 0
    %989 = vmatpush1.bf16.msra.mxu0 0
    %990 = vmatprep.subr.bf16.mxu0 0
    %991 = vmatpush1.bf16.msra.mxu0 0
    %992 = vmatprep.subr.bf16.mxu0 0
    %993 = vmatpush1.bf16.msra.mxu0 0
    %994 = vmatprep.subr.bf16.mxu0 0
    %995 = vmatpush1.bf16.msra.mxu0 0
    %996 = vmatprep.subr.bf16.mxu0 0
    %997 = vmatpush1.bf16.msra.mxu0 0
    %998 = vmatprep.subr.bf16.mxu0 0
    %999 = vmatpush1.bf16.msra.mxu0 0
    %1000 = vmatprep.subr.bf16.mxu0 0
    %1001 = vmatpush1.bf16.msra.mxu0 0
    %1002 = vmatprep.subr.bf16.mxu0 0
    %1003 = vmatpush1.bf16.msra.mxu0 0
    %1004 = vmatprep.subr.bf16.mxu0 0
    %1005 = vmatpush1.bf16.msra.mxu0 0
    %1006 = vmatprep.subr.bf16.mxu0 0
    %1007 = vmatpush1.bf16.msra.mxu0 0
    %1008 = vmatprep.subr.bf16.mxu0 0
    %1009 = vmatpush1.bf16.msra.mxu0 0
    %1010 = vmatprep.mubr.bf16.mxu0 0
    %1011 = vmatmul.mubr.bf16.gmra.mrb[0].mxu0 %v976
    %v1012 = vpop.f32.mrb[0].mxu0
    %v1013 = vadd.f32 %v973, %v1012
    %v1014 = vpop.f32.mrb[0].mxu0
    %v1015 = vpop.f32.mrb[0].mxu0
    %v1016 = vadd.f32 %v973, %v1015
    %v1017 = vpop.f32.mrb[0].mxu0
    %1018 = vdwg.mxu0
    %v1019 = vadd.f32 %v650, %v1013
    %v1020 = vadd.f32 %v651, %v1016
    %v1021 = vsel %vm146, %v1019, 0.0
    %1022 = vadd.xlane.f32.xlu0 %v1021
    %v1023 = vpop.xlane.xlu0 %1022
    %v1024 = vsel %vm146, %v1020, 0.0
    %1025 = vadd.xlane.f32.xlu0 %v1024
    %v1026 = vpop.xlane.xlu0 %1025
    %v1027 = vmul.f32 %v1023, %v153
    %v1028 = vmul.f32 %v1026, %v153
    %v1029 = vsub.f32 %v1019, %v1027
    %v1030 = vsub.f32 %v1020, %v1028
    %v1031 = vmul.f32 %v1029, %v1029
    %v1032 = vmul.f32 %v1030, %v1030
    %v1033 = vsel %vm146, %v1031, 0.0
    %1034 = vadd.xlane.f32.xlu0 %v1033
    %v1035 = vpop.xlane.xlu0 %1034
    %v1036 = vsel %vm146, %v1032, 0.0
    %1037 = vadd.xlane.f32.xlu0 %v1036
    %v1038 = vpop.xlane.xlu0 %1037
    %v1039 = vmul.f32 %v1035, %v153
    %v1040 = vmul.f32 %v1038, %v153
    %v1041 = vadd.f32 %v1039, 1e-05
    %v1042 = vadd.f32 %v1040, 1e-05
    %v1043 = vrsqrt.pop %v1041
    %v1044 = vrsqrt.pop %v1042
    %v1045 = vmul.f32 %v1029, %v1043
    %v1046 = vmul.f32 %v1030, %v1044
    %1047 = vrot.lane.b32.xlu0 %v713, 64
    %v1048 = vpop.permute.xlu0 %1047
    %v1050 = vmul.f32 %v1045, %v1048
    %v1051 = vmul.f32 %v1046, %v1048
    %1052 = vrot.lane.b32.xlu0 %v713, 32
    %v1053 = vpop.permute.xlu0 %1052
    %v1055 = vadd.f32 %v1050, %v1053
    %v1056 = vadd.f32 %v1051, %v1053
    %v1057 = vpack.c.bf16 %v1056, %v1055
    %v1058 = vlaneseq
    %v1059 = vshrl.u32 %v1058, 7
    %v1060 = vsub.s32 2, %v1059
    %v1061 = vrot.slane %v683, %v1060
    %v1063 = vsel %vm146, %v1057, 0
    %1065 = vmatprep.subr.bf16.mxu0 0
    %1066 = vmatpush1.bf16.msra.mxu0 %v669
    %1067 = vmatprep.subr.bf16.mxu0 0
    %1068 = vmatpush1.bf16.msra.mxu0 %v670
    %1069 = vmatprep.subr.bf16.mxu0 0
    %1070 = vmatpush1.bf16.msra.mxu0 0
    %1071 = vmatprep.subr.bf16.mxu0 0
    %1072 = vmatpush1.bf16.msra.mxu0 0
    %1073 = vmatprep.subr.bf16.mxu0 0
    %1074 = vmatpush1.bf16.msra.mxu0 0
    %1075 = vmatprep.subr.bf16.mxu0 0
    %1076 = vmatpush1.bf16.msra.mxu0 0
    %1077 = vmatprep.subr.bf16.mxu0 0
    %1078 = vmatpush1.bf16.msra.mxu0 0
    %1079 = vmatprep.subr.bf16.mxu0 0
    %1080 = vmatpush1.bf16.msra.mxu0 0
    %1081 = vmatprep.subr.bf16.mxu0 0
    %1082 = vmatpush1.bf16.msra.mxu0 0
    %1083 = vmatprep.subr.bf16.mxu0 0
    %1084 = vmatpush1.bf16.msra.mxu0 0
    %1085 = vmatprep.subr.bf16.mxu0 0
    %1086 = vmatpush1.bf16.msra.mxu0 0
    %1087 = vmatprep.subr.bf16.mxu0 0
    %1088 = vmatpush1.bf16.msra.mxu0 0
    %1089 = vmatprep.subr.bf16.mxu0 0
    %1090 = vmatpush1.bf16.msra.mxu0 0
    %1091 = vmatprep.subr.bf16.mxu0 0
    %1092 = vmatpush1.bf16.msra.mxu0 0
    %1093 = vmatprep.subr.bf16.mxu0 0
    %1094 = vmatpush1.bf16.msra.mxu0 0
    %1095 = vmatprep.subr.bf16.mxu0 0
    %1096 = vmatpush1.bf16.msra.mxu0 0
    %1097 = vmatprep.mubr.bf16.mxu0 0
    %1098 = vmatmul.mubr.bf16.gmra.mrb[0].mxu0 %v1063
    %v1099 = vpop.f32.mrb[0].mxu0
    %v1100 = vadd.f32 %v1061, %v1099
    %v1101 = vpop.f32.mrb[0].mxu0
    %v1102 = vpop.f32.mrb[0].mxu0
    %v1103 = vadd.f32 %v1061, %v1102
    %v1104 = vpop.f32.mrb[0].mxu0
    %1105 = vdwg.mxu0
    %v1106 = vmax.f32 %v1100, 0.0
    %v1107 = vmax.f32 %v1103, 0.0
    %v1108 = vpack.c.bf16 %v1107, %v1106
    %1110 = vrot.lane.b32.xlu0 %v1061, 64
    %v1111 = vpop.permute.xlu0 %1110
    %v1114 = vsel %vm344, %v1108, 0
    %1116 = vmatprep.subr.bf16.mxu0 0
    %1117 = vmatpush1.bf16.msra.mxu0 %v679
    %1118 = vmatprep.subr.bf16.mxu0 0
    %1119 = vmatpush1.bf16.msra.mxu0 %v680
    %1120 = vmatprep.subr.bf16.mxu0 0
    %1121 = vmatpush1.bf16.msra.mxu0 %v681
    %1122 = vmatprep.subr.bf16.mxu0 0
    %1123 = vmatpush1.bf16.msra.mxu0 %v682
    %1124 = vmatprep.subr.bf16.mxu0 0
    %1125 = vmatpush1.bf16.msra.mxu0 0
    %1126 = vmatprep.subr.bf16.mxu0 0
    %1127 = vmatpush1.bf16.msra.mxu0 0
    %1128 = vmatprep.subr.bf16.mxu0 0
    %1129 = vmatpush1.bf16.msra.mxu0 0
    %1130 = vmatprep.subr.bf16.mxu0 0
    %1131 = vmatpush1.bf16.msra.mxu0 0
    %1132 = vmatprep.subr.bf16.mxu0 0
    %1133 = vmatpush1.bf16.msra.mxu0 0
    %1134 = vmatprep.subr.bf16.mxu0 0
    %1135 = vmatpush1.bf16.msra.mxu0 0
    %1136 = vmatprep.subr.bf16.mxu0 0
    %1137 = vmatpush1.bf16.msra.mxu0 0
    %1138 = vmatprep.subr.bf16.mxu0 0
    %1139 = vmatpush1.bf16.msra.mxu0 0
    %1140 = vmatprep.subr.bf16.mxu0 0
    %1141 = vmatpush1.bf16.msra.mxu0 0
    %1142 = vmatprep.subr.bf16.mxu0 0
    %1143 = vmatpush1.bf16.msra.mxu0 0
    %1144 = vmatprep.subr.bf16.mxu0 0
    %1145 = vmatpush1.bf16.msra.mxu0 0
    %1146 = vmatprep.subr.bf16.mxu0 0
    %1147 = vmatpush1.bf16.msra.mxu0 0
    %1148 = vmatprep.mubr.bf16.mxu0 0
    %1149 = vmatmul.mubr.bf16.gmra.mrb[0].mxu0 %v1114
    %v1150 = vpop.f32.mrb[0].mxu0
    %v1151 = vadd.f32 %v1111, %v1150
    %v1152 = vpop.f32.mrb[0].mxu0
    %v1153 = vpop.f32.mrb[0].mxu0
    %v1154 = vadd.f32 %v1111, %v1153
    %v1155 = vpop.f32.mrb[0].mxu0
    %1156 = vdwg.mxu0
    %v1157 = vadd.f32 %v1019, %v1151
    %v1158 = vadd.f32 %v1020, %v1154
    %1159 = vst.msk [vmem:[#allocation5] sm:$0xff] %vm146, %v1157
    %1160 = vst.msk [vmem:[#allocation5 + $0x8] sm:$0xff] %vm146, %v1158
    // Predicated region
    $region18: #{decoder_forward.1} parent=1 // pred_check
      _
    $region19: #{decoder_forward.1} parent=1 // pred_check_branch
      %1162 = sbr.rel (0) target = $region21
    $region20: #{decoder_forward.1} parent=1 // pred_region
      %s1164 = ssub.s32 256, 256
      %1165 = vsyncadd [#allocation3], %s1164
      %s1166 = sshll.u32 [#allocation5], 4
      %s1167 = int_to_ptr.vmem [resolvable:$true] %s1166
      %1172 = dma.vmem_to_hbm [thread:$0]  %s1167, 256, %s3, [#allocation3], 128, 128, 8
    $region21: #{decoder_forward.1} parent=1 // pred_fallthru
      _
    // Predicated region
    $region22: #{decoder_forward.1} parent=1 // pred_check
      _
    $region23: #{decoder_forward.1} parent=1 // pred_check_branch
      %1174 = sbr.rel (0) target = $region25
    $region24: #{decoder_forward.1} parent=1 // pred_region
      %1175 = dma.done [#allocation3], 256
    $region25: #{decoder_forward.1} parent=1 // pred_fallthru
      _
    %1176 = vsyncpa [#allocation3], 1
    %1177 = vsyncpa [#allocation4], 1

</llo_original>
